<compile_context>
chip_gen: v5e
topology: v5e:2x2
jax: 0.10.0
libtpu: 0.0.40
codegen_flags: <defaults>
</compile_context>

<pallas_src>
import jax
import jax.numpy as jnp
from jax.experimental import pallas as pl
from jax.experimental.pallas import tpu as pltpu

_MIB = 1024 * 1024

# Explicit MXU precision for the f32 matmuls (see header note / TODO).
_DOT_PRECISION = jax.lax.Precision.HIGHEST


def _centered_idft_matrix(n: int) -> jnp.ndarray:
    """Complex (n, n) matrix M with M @ v == fftshift(ifft(ifftshift(v), norm='ortho'))."""
    eye = jnp.eye(n, dtype=jnp.complex64)
    m = jnp.fft.ifftshift(eye, axes=0)
    m = jnp.fft.ifft(m, axis=0, norm="ortho")
    m = jnp.fft.fftshift(m, axes=0)
    return m


def _vmem_capacity_bytes() -> int:
    """Per-TensorCore VMEM capacity; conservative (v7x) fallback if unknown."""
    try:
        return int(pltpu.get_tpu_info().vmem_capacity_bytes)
    except Exception:
        return 64 * _MIB


def _budgets():
    """(tile-batch selection budget, vmem_limit_bytes cap), generation-aware."""
    cap = _vmem_capacity_bytes()
    if cap >= 96 * _MIB:            # v5e / v6e: 128 MiB VMEM per TensorCore
        return 96 * _MIB, 100 * _MIB
    return 44 * _MIB, 48 * _MIB     # v7x: 64 MiB VMEM per TensorCore


def _vmem_need_bytes(tb: int, hh: int, wp: int) -> int:
    """High-water VMEM estimate for one grid step (f32 everywhere).

    Counts: input block (2x double-buffered) + output block (2x) + t scratch
    (1x) + uv matmul result (2x, it is 2*Wp wide) + epilogue temporaries (~1x)
    + 1 block margin, plus the double-buffered constant matrices.
    """
    blk = 4 * tb * hh * wp
    mats = 4 * (hh * hh + 2 * wp * wp)          # fused M + fused [Br | Bi]
    return 9 * blk + 2 * mats


def _choose_tile_batch(n: int, h: int, wp: int, budget: int) -> int:
    """Images per grid step.  Prefer >=4 grid steps (2 per v7x core) with a
    non-trivial TB, then >=2 steps (pipelining), then the largest TB that fits
    the generation-aware VMEM budget.  N is padded to a TB multiple later."""
    hh = 2 * h
    cands = [tb for tb in (16, 8, 4, 2, 1) if tb <= n] or [1]
    for min_grid, min_tb in ((4, 2), (2, 2), (2, 1), (1, 1)):
        for tb in cands:                        # largest first
            if tb < min_tb or pl.cdiv(n, tb) < min_grid:
                continue
            if _vmem_need_bytes(tb, hh, wp) <= budget:
                return tb
    return 1


def _ifft2c_kernel(x_ref, m_ref, b2_ref, o_ref, t_ref):
    """One grid step: TB images, each stored as a (2H, Wp) slab [real; imag]."""
    tb, hh, wp = x_ref.shape                    # hh == 2*H, wp % 128 == 0
    h = hh // 2
    m = m_ref[...]                              # (2H, 2H) = [[Ar,-Ai],[Ai,Ar]]

    # Stage 1 (fused complex row transform): T_b = M @ X_b, written straight
    # into the VMEM scratch with static slice stores (no concat temporaries;
    # each iteration's live range ends at its store).
    for b in range(tb):
        t_ref[pl.ds(b * hh, hh), :] = jnp.dot(
            m, x_ref[b],
            precision=_DOT_PRECISION, preferred_element_type=jnp.float32)

    # Stage 2 (column transform): ONE big batched matmul against the fused
    # RHS [Br | Bi]  ->  (TB*2H, 2*Wp); per image the row blocks are
    #   rows [0,H)  = [Tr@Br | Tr@Bi]      rows [H,2H) = [Ti@Br | Ti@Bi]
    uv = jnp.dot(t_ref[...], b2_ref[...],
                 precision=_DOT_PRECISION, preferred_element_type=jnp.float32)
    uv = uv.reshape(tb, hh, 2 * wp)             # split leading sublane dim

    # Epilogue: whole-batch real/imag recombination on the VPU, two aligned
    # (sublane at H, lane at Wp) block stores.
    o_ref[:, :h, :] = uv[:, :h, :wp] - uv[:, h:, wp:]   # Tr@Br - Ti@Bi
    o_ref[:, h:, :] = uv[:, :h, wp:] + uv[:, h:, :wp]   # Tr@Bi + Ti@Br


def ifft_module(x, tile_batch=None):
    """Pallas implementation of IFFT.forward. x: (N, 2, H, W) float32 -> (N, 2, H, W)."""
    x = x.astype(jnp.float32)
    N, C, H, W = x.shape
    assert C == 2, "channel dim must be (real, imag)"
    HH = 2 * H
    # Lane-pad W to a multiple of 128 (unmasked stores, clean MXU tiles,
    # vreg-aligned [Br|Bi] slice boundary).  Padding sliced off at the end.
    Wp = W if W % 128 == 0 else int(pl.cdiv(W, 128)) * 128

    # Constant centered-IDFT matrices (constant-fold under jit).
    A = _centered_idft_matrix(H)                 # (H, H) complex
    B = _centered_idft_matrix(W).T               # (W, W) complex  (= A_W^T)
    Ar = jnp.real(A).astype(jnp.float32)
    Ai = jnp.imag(A).astype(jnp.float32)
    Br = jnp.real(B).astype(jnp.float32)
    Bi = jnp.imag(B).astype(jnp.float32)
    fused_m = jnp.block([[Ar, -Ai], [Ai, Ar]])   # (2H, 2H)
    if Wp != W:
        Br = jnp.pad(Br, ((0, Wp - W), (0, Wp - W)))
        Bi = jnp.pad(Bi, ((0, Wp - W), (0, Wp - W)))
    fused_b = jnp.concatenate([Br, Bi], axis=1)  # (Wp, 2*Wp)

    tb_budget, limit_cap = _budgets()
    tb = tile_batch if tile_batch is not None else _choose_tile_batch(N, H, Wp, tb_budget)
    n_pad = int(pl.cdiv(N, tb)) * tb

    # (N, 2, H, W) -> (N, 2H, W): free contiguous reshape; zero-pad batch to a
    # TB multiple and lanes to Wp (zeros in -> zeros out, sliced off below).
    x2 = x.reshape(N, HH, W)
    if n_pad != N or Wp != W:
        x2 = jnp.pad(x2, ((0, n_pad - N), (0, 0), (0, Wp - W)))
    grid = (n_pad // tb,)

    # Advisory cost estimate so XLA schedules surrounding ops sensibly.
    flops = 2 * n_pad * HH * Wp * (HH + 2 * Wp)
    bytes_accessed = 4 * (2 * n_pad * HH * Wp + HH * HH + 2 * Wp * Wp)
    cost = pl.CostEstimate(flops=int(flops), transcendentals=0,
                           bytes_accessed=int(bytes_accessed))

    # Generation-aware scoped VMEM limit with headroom over the recomputed
    # high-water estimate (capped below the physical per-core capacity).
    need = _vmem_need_bytes(tb, HH, Wp)
    vmem_limit = int(min(limit_cap, max(32 * _MIB, int(1.15 * need) + 2 * _MIB)))

    out2 = pl.pallas_call(
        _ifft2c_kernel,
        out_shape=jax.ShapeDtypeStruct((n_pad, HH, Wp), jnp.float32),
        grid_spec=pltpu.PrefetchScalarGridSpec(
            num_scalar_prefetch=0,
            grid=grid,
            in_specs=[
                pl.BlockSpec((tb, HH, Wp), lambda n: (n, 0, 0)),   # k-space slabs
                pl.BlockSpec((HH, HH), lambda n: (0, 0)),          # fused [[Ar,-Ai],[Ai,Ar]]
                pl.BlockSpec((Wp, 2 * Wp), lambda n: (0, 0)),      # fused [Br | Bi]
            ],
            out_specs=pl.BlockSpec((tb, HH, Wp), lambda n: (n, 0, 0)),
            scratch_shapes=[pltpu.VMEM((tb * HH, Wp), jnp.float32)],  # t-buffer
        ),
        compiler_params=pltpu.CompilerParams(
            dimension_semantics=("parallel",),
            vmem_limit_bytes=vmem_limit,
        ),
        cost_estimate=cost,
    )(x2, fused_m, fused_b)

    out2 = out2[:N, :, :W]
    return out2.reshape(N, 2, H, W)


def _reference(x: jnp.ndarray) -> jnp.ndarray:
    """Pure-JAX reference mirroring fastmri.ifft2c on (N, 2, H, W)."""
    xc = x[:, 0].astype(jnp.complex64) + 1j * x[:, 1].astype(jnp.complex64)  # (N, H, W)
    xc = jnp.fft.ifftshift(xc, axes=(-2, -1))
    xc = jnp.fft.ifft2(xc, axes=(-2, -1), norm="ortho")
    xc = jnp.fft.fftshift(xc, axes=(-2, -1))
    return jnp.stack([jnp.real(xc), jnp.imag(xc)], axis=1).astype(jnp.float32)


if __name__ == "__main__":
    key = jax.random.PRNGKey(0)
    # C=2 is required by the module (real/imag k-space channels); N=4 so the
    # batched (TB=2, grid=2) path is exercised; W=16 exercises the lane-pad.
    N, C, H, W = 4, 2, 16, 16
    x = jax.random.normal(key, (N, C, H, W), dtype=jnp.float32)

    ifft = jax.jit(ifft_module)
    out = jax.block_until_ready(ifft(x))

    ref = _reference(x)
    assert out.shape == (N, 2, H, W)
    assert jnp.allclose(out, ref, atol=1e-4, rtol=1e-4), "mismatch vs reference"

    print("KERNEL_OK")
</pallas_src>

<mosaic_0001>
module attributes {stable_mosaic.version = 11 : i64} {
  func.func @_ifft2c_kernel(%arg0: i32, %arg1: memref<2x32x128xf32, #tpu.memory_space<vmem>>, %arg2: memref<32x32xf32, #tpu.memory_space<vmem>>, %arg3: memref<128x256xf32, #tpu.memory_space<vmem>>, %arg4: memref<2x32x128xf32, #tpu.memory_space<vmem>>, %arg5: memref<64x128xf32, #tpu.memory_space<vmem>>) attributes {dimension_semantics = [#tpu.dimension_semantics<parallel>], iteration_bounds = array<i64: 2>, scalar_prefetch = 0 : i64, scratch_operands = 1 : i64, tpu.core_type = #tpu.core_type<tc>, window_params = [{transform_indices = @transform_0, window_bounds = array<i64: 2, 32, 128>}, {pipeline_mode = #tpu.pipeline_mode<synchronous>, transform_indices = @transform_1, window_bounds = array<i64: 32, 32>}, {pipeline_mode = #tpu.pipeline_mode<synchronous>, transform_indices = @transform_2, window_bounds = array<i64: 128, 256>}, {transform_indices = @transform_3, window_bounds = array<i64: 2, 32, 128>}]} {
    %c0 = arith.constant 0 : index
    %c0_0 = arith.constant 0 : index
    %0 = vector.load %arg2[%c0, %c0_0] : memref<32x32xf32, #tpu.memory_space<vmem>>, vector<32x32xf32>
    %c0_1 = arith.constant 0 : index
    %c0_2 = arith.constant 0 : index
    %c0_3 = arith.constant 0 : index
    %1 = vector.load %arg1[%c0_1, %c0_2, %c0_3] : memref<2x32x128xf32, #tpu.memory_space<vmem>>, vector<1x32x128xf32>
    %2 = vector.shape_cast %1 : vector<1x32x128xf32> to vector<32x128xf32>
    %cst = arith.constant dense<0.000000e+00> : vector<32x128xf32>
    %3 = tpu.matmul %0, %2, %cst {dimension_numbers = #tpu.dot_dimension_numbers<[1], [0], [0], [1], [0, 0, 1, 1], [], []>, precision = #tpu.contract_precision<fp32>} : vector<32x32xf32>, vector<32x128xf32>, vector<32x128xf32> -> vector<32x128xf32>
    %c0_4 = arith.constant 0 : index
    %c0_5 = arith.constant 0 : index
    %4 = vector.load %arg5[%c0_4, %c0_5] : memref<64x128xf32, #tpu.memory_space<vmem>>, vector<32x128xf32>
    tpu.vector_store %arg5[%c0_4, %c0_5], %3 {strides = array<i32>} : memref<64x128xf32, #tpu.memory_space<vmem>>, vector<32x128xf32>,
    %c1 = arith.constant 1 : index
    %c0_6 = arith.constant 0 : index
    %c0_7 = arith.constant 0 : index
    %5 = vector.load %arg1[%c1, %c0_6, %c0_7] : memref<2x32x128xf32, #tpu.memory_space<vmem>>, vector<1x32x128xf32>
    %6 = vector.shape_cast %5 : vector<1x32x128xf32> to vector<32x128xf32>
    %cst_8 = arith.constant dense<0.000000e+00> : vector<32x128xf32>
    %7 = tpu.matmul %0, %6, %cst_8 {dimension_numbers = #tpu.dot_dimension_numbers<[1], [0], [0], [1], [0, 0, 1, 1], [], []>, precision = #tpu.contract_precision<fp32>} : vector<32x32xf32>, vector<32x128xf32>, vector<32x128xf32> -> vector<32x128xf32>
    %c32 = arith.constant 32 : index
    %c0_9 = arith.constant 0 : index
    %8 = vector.load %arg5[%c32, %c0_9] : memref<64x128xf32, #tpu.memory_space<vmem>>, vector<32x128xf32>
    tpu.vector_store %arg5[%c32, %c0_9], %7 {strides = array<i32>} : memref<64x128xf32, #tpu.memory_space<vmem>>, vector<32x128xf32>,
    %c0_10 = arith.constant 0 : index
    %c0_11 = arith.constant 0 : index
    %9 = vector.load %arg5[%c0_10, %c0_11] : memref<64x128xf32, #tpu.memory_space<vmem>>, vector<64x128xf32>
    %c0_12 = arith.constant 0 : index
    %c0_13 = arith.constant 0 : index
    %10 = vector.load %arg3[%c0_12, %c0_13] : memref<128x256xf32, #tpu.memory_space<vmem>>, vector<128x256xf32>
    %cst_14 = arith.constant dense<0.000000e+00> : vector<64x256xf32>
    %11 = tpu.matmul %9, %10, %cst_14 {dimension_numbers = #tpu.dot_dimension_numbers<[1], [0], [0], [1], [0, 0, 1, 1], [], []>, precision = #tpu.contract_precision<fp32>} : vector<64x128xf32>, vector<128x256xf32>, vector<64x256xf32> -> vector<64x256xf32>
    %12 = vector.shape_cast %11 : vector<64x256xf32> to vector<2x32x256xf32>
    %13 = vector.extract_strided_slice %12 {offsets = [0, 0, 0], sizes = [2, 16, 128], strides = [1, 1, 1]} : vector<2x32x256xf32> to vector<2x16x128xf32>
    %14 = vector.extract_strided_slice %12 {offsets = [0, 16, 128], sizes = [2, 16, 128], strides = [1, 1, 1]} : vector<2x32x256xf32> to vector<2x16x128xf32>
    %15 = arith.subf %13, %14 : vector<2x16x128xf32>
    %c0_15 = arith.constant 0 : index
    %c0_16 = arith.constant 0 : index
    %c0_17 = arith.constant 0 : index
    %16 = vector.load %arg4[%c0_15, %c0_16, %c0_17] : memref<2x32x128xf32, #tpu.memory_space<vmem>>, vector<2x16x128xf32>
    tpu.vector_store %arg4[%c0_15, %c0_16, %c0_17], %15 {strides = array<i32>} : memref<2x32x128xf32, #tpu.memory_space<vmem>>, vector<2x16x128xf32>,
    %17 = vector.extract_strided_slice %12 {offsets = [0, 0, 128], sizes = [2, 16, 128], strides = [1, 1, 1]} : vector<2x32x256xf32> to vector<2x16x128xf32>
    %18 = vector.extract_strided_slice %12 {offsets = [0, 16, 0], sizes = [2, 16, 128], strides = [1, 1, 1]} : vector<2x32x256xf32> to vector<2x16x128xf32>
    %19 = arith.addf %17, %18 : vector<2x16x128xf32>
    %c0_18 = arith.constant 0 : index
    %c16 = arith.constant 16 : index
    %c0_19 = arith.constant 0 : index
    %20 = vector.load %arg4[%c0_18, %c16, %c0_19] : memref<2x32x128xf32, #tpu.memory_space<vmem>>, vector<2x16x128xf32>
    tpu.vector_store %arg4[%c0_18, %c16, %c0_19], %19 {strides = array<i32>} : memref<2x32x128xf32, #tpu.memory_space<vmem>>, vector<2x16x128xf32>,
    return
  }
  func.func @transform_0(%arg0: i32) -> (i32, i32, i32) {
    %c0_i32 = arith.constant 0 : i32
    %c0_i32_0 = arith.constant 0 : i32
    %c0_i32_1 = arith.constant 0 : i32
    return %arg0, %c0_i32, %c0_i32_0 : i32, i32, i32
  }
  func.func @transform_1(%arg0: i32) -> (i32, i32) {
    %c0_i32 = arith.constant 0 : i32
    %c0_i32_0 = arith.constant 0 : i32
    %c0_i32_1 = arith.constant 0 : i32
    return %c0_i32, %c0_i32_0 : i32, i32
  }
  func.func @transform_2(%arg0: i32) -> (i32, i32) {
    %c0_i32 = arith.constant 0 : i32
    %c0_i32_0 = arith.constant 0 : i32
    %c0_i32_1 = arith.constant 0 : i32
    return %c0_i32, %c0_i32_0 : i32, i32
  }
  func.func @transform_3(%arg0: i32) -> (i32, i32, i32) {
    %c0_i32 = arith.constant 0 : i32
    %c0_i32_0 = arith.constant 0 : i32
    %c0_i32_1 = arith.constant 0 : i32
    return %arg0, %c0_i32, %c0_i32_0 : i32, i32, i32
  }
}

</mosaic_0001>

<llo_original>
// kernel: ifft_module.1
$region0: #{ifft_module.1}
  #allocation0 [shape = 'u32[]', space=smem, size = 0x4, offset = 0x4, fixed_abs, tag = 'smem constant byte address 0x4 - core index']
  #allocation1 [shape = 'u32[72,128]{1,0:T(1,128)}', space=vmem, size = 0x9000, scoped, tag = 'internal scratch']
  #allocation2 [shape = 'f32[64,128]{1,0:T(8,128)}', space=vmem, size = 0x8000, scoped, tag = 'scratch operand']
  %s0 = inlined_call_operand.vmem [shape: f32[4,32,128], index: 0, kind: input, shape index: {}]
  %s1 = inlined_call_operand.vmem [shape: f32[32,32], index: 1, kind: input, shape index: {}]
  %s2 = inlined_call_operand.vmem [shape: f32[128,256], index: 2, kind: input, shape index: {}]
  %s3 = inlined_call_operand.hbm [shape: f32[4,32,128], index: 3, kind: output, shape index: {}]
  %s4 = sld [smem:[#allocation0]]
  $region45: #{ifft_module.1} parent=0
    _
  %s6 = ssub.s32 1, %s4
  %s7 = scalar_select 0, %s6, %s4
  $region1: #{ifft_module.1} parent=0
    #allocation3 [shape = 'u8[65536]{0}', space=vmem, size = 0x10000, scoped, tag = 'output window, operand 0']
    #allocation4 [shape = 's32[2]{0}', space=sflag, size = 0x8, scoped, tag = 'scoped memory for ifft_module.1']
    %8 = vsyncpa [#allocation4], 0
    %s9 = scalar_lea.sflag [#allocation4], 1
    %10 = vsyncpa %s9, 0
    loop: start=0, step=1, limit=4
    $region2: #{ifft_module.1} parent=1 // loop_pre_header
      _
    $region3: #{ifft_module.1} parent=1 // loop_header
      %s12 = sphi 0, %s16
      %p13 = scmp.ge.s32.totalorder %s12, 4
      %s22 = sphi 0, %s24
      %s25 = sphi 0, %s22
      %s26 = sphi 0, %s25
      %s42 = sphi 0, %s26
      %s46 = sphi 0, %s46
      %s48 = sphi 0, %s46
      %s49 = sphi 0, %s48
      %s63 = sphi 0, %s49
      %s67 = sphi 0, %s67
      %s69 = sphi 0, %s67
      %s70 = sphi 0, %s69
      %s84 = sphi 0, %s70
      %s90 = sphi 0, %s92
      %s93 = sphi 0, %s90
      %s94 = sphi 0, %s93
      %s110 = sphi 0, %s94
    $region4: #{ifft_module.1} parent=1 // loop_header_branch
      %15 = sbr.rel (%p13) target = $region8
    $region5: #{ifft_module.1} parent=1 // loop_body
      %s17 = ssub.s32 %s12, 1
      %s18 = ssub.s32 %s12, 2
      %s19 = sadd.s32 %s12, 1
      %s20 = ssub.s32 %s12, %s19
      %p21 = scmp.eq.s32.totalorder %s20, 0
      %s23 = sadd.s32 %s22, 1
      %s24 = scalar_select %p21, %s22, %s23
      %p27 = pneg %p21
      %p28 = scmp.eq.s32.totalorder %s12, 1
      %p29 = por %p27, %p28
      %p30 = scmp.ne.s32.totalorder %s22, %s25
      %p31 = scmp.eq.s32.totalorder %s12, 0
      %p32 = por %p30, %p31
      %p33 = scmp.ne.s32.totalorder %s22, %s25
      %p34 = scmp.eq.s32.totalorder %s17, 1
      %p35 = por %p33, %p34
      %p36 = scmp.ne.s32.totalorder %s25, %s26
      %p37 = scmp.eq.s32.totalorder %s17, 0
      %p38 = por %p36, %p37
      %p39 = scmp.ne.s32.totalorder %s25, %s26
      %p40 = scmp.eq.s32.totalorder %s18, 1
      %p41 = por %p39, %p40
      %p43 = scmp.ne.s32.totalorder %s26, %s42
      %p44 = scmp.eq.s32.totalorder %s18, 0
      %p45 = por %p43, %p44
      %s47 = sadd.s32 %s46, 1
      %p50 = scmp.eq.s32.totalorder %s12, 1
      %p51 = scmp.ne.s32.totalorder %s46, %s48
      %p52 = scmp.eq.s32.totalorder %s12, 0
      %p53 = por %p51, %p52
      %p54 = scmp.ne.s32.totalorder %s46, %s48
      %p55 = scmp.eq.s32.totalorder %s17, 1
      %p56 = por %p54, %p55
      %p57 = scmp.ne.s32.totalorder %s48, %s49
      %p58 = scmp.eq.s32.totalorder %s17, 0
      %p59 = por %p57, %p58
      %p60 = scmp.ne.s32.totalorder %s48, %s49
      %p61 = scmp.eq.s32.totalorder %s18, 1
      %p62 = por %p60, %p61
      %p64 = scmp.ne.s32.totalorder %s49, %s63
      %p65 = scmp.eq.s32.totalorder %s18, 0
      %p66 = por %p64, %p65
      %s68 = sadd.s32 %s67, 1
      %p71 = scmp.eq.s32.totalorder %s12, 1
      %p72 = scmp.ne.s32.totalorder %s67, %s69
      %p73 = scmp.eq.s32.totalorder %s12, 0
      %p74 = por %p72, %p73
      %p75 = scmp.ne.s32.totalorder %s67, %s69
      %p76 = scmp.eq.s32.totalorder %s17, 1
      %p77 = por %p75, %p76
      %p78 = scmp.ne.s32.totalorder %s69, %s70
      %p79 = scmp.eq.s32.totalorder %s17, 0
      %p80 = por %p78, %p79
      %p81 = scmp.ne.s32.totalorder %s69, %s70
      %p82 = scmp.eq.s32.totalorder %s18, 1
      %p83 = por %p81, %p82
      %p85 = scmp.ne.s32.totalorder %s70, %s84
      %p86 = scmp.eq.s32.totalorder %s18, 0
      %p87 = por %p85, %p86
      %s88 = ssub.s32 %s12, %s19
      %p89 = scmp.eq.s32.totalorder %s88, 0
      %s91 = sadd.s32 %s90, 1
      %s92 = scalar_select %p89, %s90, %s91
      %p95 = pneg %p89
      %p96 = scmp.eq.s32.totalorder %s12, 1
      %p97 = por %p95, %p96
      %p98 = scmp.ne.s32.totalorder %s90, %s93
      %p99 = scmp.eq.s32.totalorder %s12, 0
      %p100 = por %p98, %p99
      %p101 = scmp.ne.s32.totalorder %s90, %s93
      %p102 = scmp.eq.s32.totalorder %s17, 1
      %p103 = por %p101, %p102
      %p104 = scmp.ne.s32.totalorder %s93, %s94
      %p105 = scmp.eq.s32.totalorder %s17, 0
      %p106 = por %p104, %p105
      %p107 = scmp.ne.s32.totalorder %s93, %s94
      %p108 = scmp.eq.s32.totalorder %s18, 1
      %p109 = por %p107, %p108
      %p111 = scmp.ne.s32.totalorder %s94, %s110
      %p112 = scmp.eq.s32.totalorder %s18, 0
      %p113 = por %p111, %p112
      %p114 = scmp.le.s32.totalorder 1, %s12
      %p115 = scmp.lt.s32.totalorder %s12, 3
      %p116 = pnand %p114, %p115
      %p117 = pneg %p116
      // Predicated region
      $region9: #{ifft_module.1} parent=5 // pred_check
        _
      $region10: #{ifft_module.1} parent=5 // pred_check_branch
        %119 = sbr.rel (%p116) target = $region12
      $region11: #{ifft_module.1} parent=5 // pred_region
        %s120 = ssub.s32 %s12, 1
        // Predicated region
        $region13: #{ifft_module.1} parent=11 // pred_check
          %p121 = pneg %p59
        $region14: #{ifft_module.1} parent=11 // pred_check_branch
          %123 = sbr.rel (%p121) target = $region16
        $region15: #{ifft_module.1} parent=11 // pred_region
          _
        $region16: #{ifft_module.1} parent=11 // pred_fallthru
          _
        // Predicated region
        $region17: #{ifft_module.1} parent=11 // pred_check
          %p124 = pneg %p80
        $region18: #{ifft_module.1} parent=11 // pred_check_branch
          %126 = sbr.rel (%p124) target = $region20
        $region19: #{ifft_module.1} parent=11 // pred_region
          _
        $region20: #{ifft_module.1} parent=11 // pred_fallthru
          _
      $region12: #{ifft_module.1} parent=5 // pred_fallthru
        _
      %p127 = scmp.lt.s32.totalorder %s12, 2
      // Predicated region
      $region21: #{ifft_module.1} parent=5 // pred_check
        %p128 = pneg %p127
      $region22: #{ifft_module.1} parent=5 // pred_check_branch
        %130 = sbr.rel (%p128) target = $region24
      $region23: #{ifft_module.1} parent=5 // pred_region
        // Predicated region
        $region25: #{ifft_module.1} parent=23 // pred_check
          %p131 = pneg %p32
        $region26: #{ifft_module.1} parent=23 // pred_check_branch
          %133 = sbr.rel (%p131) target = $region28
        $region27: #{ifft_module.1} parent=23 // pred_region
          %s134 = smul.u32 2, %s12
          %p135 = scmp.lt.s32.totalorder %s134, 3
          %s136 = scalar_select %p135, %s134, 3
          %s137 = smul.addr %s136, 4
          %s138 = smul.addr %s137, 8
          %s139 = scalar_lea.vmem %s0, %s138
          %s140 = smul.u32 2, %s12
        $region28: #{ifft_module.1} parent=23 // pred_fallthru
          _
      $region24: #{ifft_module.1} parent=5 // pred_fallthru
        _
      %p141 = scmp.le.s32.totalorder 1, %s12
      %p142 = scmp.lt.s32.totalorder %s12, 3
      %p143 = pnand %p141, %p142
      %p144 = pneg %p143
      // Predicated region
      $region29: #{ifft_module.1} parent=5 // pred_check
        _
      $region30: #{ifft_module.1} parent=5 // pred_check_branch
        %146 = sbr.rel (%p143) target = $region32
      $region31: #{ifft_module.1} parent=5 // pred_region
        %s147 = ssub.s32 %s12, 1
        %s148 = smul.u32 2, %s17
        %p149 = scmp.lt.s32.totalorder %s148, 3
        %s150 = scalar_select %p149, %s148, 3
        %s151 = smul.addr %s150, 4
        %s152 = smul.addr %s151, 8
        %s153 = scalar_lea.vmem %s0, %s152
        %p154 = pneg %p38
        %p155 = pneg %p35
        %p156 = pneg %p59
        %p157 = pneg %p56
        %p158 = pneg %p80
        %p159 = pneg %p77
        %p160 = pneg %p106
        %p161 = pneg %p103
        %s162 = sand.u32 %s93, 1
        %s163 = scalar_lea.sflag [#allocation4], %s162
        %s164 = sand.u32 %s93, 1
        %s165 = smul.addr %s164, 64
        %s166 = scalar_lea.vmem [#allocation3], %s165
        %s167 = smul.u32 2, %s17
        %p168 = scmp.lt.s32.totalorder %s167, 3
        %s169 = scalar_select %p168, %s167, 3
        %s170 = smul.addr %s169, 4
        %s171 = smul.addr %s170, 8
        %s172 = scalar_lea.vmem %s0, %s171
        %s173 = smul.u32 2, %s17
        %s174 = smul.u32 2, %s17
        %v175 = vld [vmem:[%s1] sm:$0xff]
        %v176 = vld [vmem:[%s1 + $0x8] sm:$0xff]
        %v177 = vld [vmem:[%s1 + $0x10] sm:$0xff]
        %v178 = vld [vmem:[%s1 + $0x18] sm:$0xff]
        %v179 = vld [vmem:[%s172] sm:$0xff]
        %v180 = vld [vmem:[%s172 + $0x8] sm:$0xff]
        %v181 = vld [vmem:[%s172 + $0x10] sm:$0xff]
        %v182 = vld [vmem:[%s172 + $0x18] sm:$0xff]
        %vm183 = vcmask 261120
        %v185 = vsel %vm183, %v175, 0
        %v188 = vsel %vm183, %v176, 0
        %v191 = vsel %vm183, %v177, 0
        %v194 = vsel %vm183, %v178, 0
        %196 = vmatpush.msra.mxu0 0.0
        %197 = vmatpush.msra.mxu0 0.0
        %198 = vmatpush.msra.mxu0 0.0
        %199 = vmatpush.msra.mxu0 0.0
        %200 = vmatpush.msra.mxu0 0.0
        %201 = vmatpush.msra.mxu0 0.0
        %202 = vmatpush.msra.mxu0 0.0
        %203 = vmatpush.msra.mxu0 0.0
        %204 = vmatpush.msra.mxu0 0.0
        %205 = vmatpush.msra.mxu0 0.0
        %206 = vmatpush.msra.mxu0 0.0
        %207 = vmatpush.msra.mxu0 0.0
        %v208 = vand.u32 %v182, 4294901760
        %209 = vmatpush.msra.mxu0 %v208
        %v210 = vand.u32 %v181, 4294901760
        %211 = vmatpush.msra.mxu0 %v210
        %v212 = vand.u32 %v180, 4294901760
        %213 = vmatpush.msra.mxu0 %v212
        %v214 = vand.u32 %v179, 4294901760
        %215 = vmatpush.msra.mxu0 %v214
        %v216 = vand.u32 %v185, 4294901760
        %v217 = vsub.f32 %v185, %v216
        %v218 = vand.u32 %v217, 4294901760
        %v219 = vsub.f32 %v217, %v218
        %v220 = vand.u32 %v219, 4294901760
        %221 = vmatmul.f32.gmra.mxu0 %v220
        %v222 = vpop.f32.mrf.mxu0
        %v223 = vadd.f32 0.0, %v222
        %v224 = vand.u32 %v188, 4294901760
        %v225 = vsub.f32 %v188, %v224
        %v226 = vand.u32 %v225, 4294901760
        %v227 = vsub.f32 %v225, %v226
        %v228 = vand.u32 %v227, 4294901760
        %229 = vmatmul.f32.gmra.mxu0 %v228
        %v230 = vpop.f32.mrf.mxu0
        %v231 = vadd.f32 0.0, %v230
        %v232 = vand.u32 %v191, 4294901760
        %v233 = vsub.f32 %v191, %v232
        %v234 = vand.u32 %v233, 4294901760
        %v235 = vsub.f32 %v233, %v234
        %v236 = vand.u32 %v235, 4294901760
        %237 = vmatmul.f32.gmra.mxu0 %v236
        %v238 = vpop.f32.mrf.mxu0
        %v239 = vadd.f32 0.0, %v238
        %v240 = vand.u32 %v194, 4294901760
        %v241 = vsub.f32 %v194, %v240
        %v242 = vand.u32 %v241, 4294901760
        %v243 = vsub.f32 %v241, %v242
        %v244 = vand.u32 %v243, 4294901760
        %245 = vmatmul.f32.gmra.mxu0 %v244
        %v246 = vpop.f32.mrf.mxu0
        %v247 = vadd.f32 0.0, %v246
        %248 = vdwg.mxu0
        %249 = vmatpush.msra.mxu0 0.0
        %250 = vmatpush.msra.mxu0 0.0
        %251 = vmatpush.msra.mxu0 0.0
        %252 = vmatpush.msra.mxu0 0.0
        %253 = vmatpush.msra.mxu0 0.0
        %254 = vmatpush.msra.mxu0 0.0
        %255 = vmatpush.msra.mxu0 0.0
        %256 = vmatpush.msra.mxu0 0.0
        %257 = vmatpush.msra.mxu0 0.0
        %258 = vmatpush.msra.mxu0 0.0
        %259 = vmatpush.msra.mxu0 0.0
        %260 = vmatpush.msra.mxu0 0.0
        %v261 = vand.u32 %v182, 4294901760
        %v262 = vsub.f32 %v182, %v261
        %v263 = vand.u32 %v262, 4294901760
        %v264 = vsub.f32 %v262, %v263
        %v265 = vand.u32 %v264, 4294901760
        %266 = vmatpush.msra.mxu0 %v265
        %v267 = vand.u32 %v181, 4294901760
        %v268 = vsub.f32 %v181, %v267
        %v269 = vand.u32 %v268, 4294901760
        %v270 = vsub.f32 %v268, %v269
        %v271 = vand.u32 %v270, 4294901760
        %272 = vmatpush.msra.mxu0 %v271
        %v273 = vand.u32 %v180, 4294901760
        %v274 = vsub.f32 %v180, %v273
        %v275 = vand.u32 %v274, 4294901760
        %v276 = vsub.f32 %v274, %v275
        %v277 = vand.u32 %v276, 4294901760
        %278 = vmatpush.msra.mxu0 %v277
        %v279 = vand.u32 %v179, 4294901760
        %v280 = vsub.f32 %v179, %v279
        %v281 = vand.u32 %v280, 4294901760
        %v282 = vsub.f32 %v280, %v281
        %v283 = vand.u32 %v282, 4294901760
        %284 = vmatpush.msra.mxu0 %v283
        %v285 = vand.u32 %v185, 4294901760
        %286 = vmatmul.f32.gmra.mxu0 %v285
        %v287 = vpop.f32.mrf.mxu0
        %v288 = vadd.f32 %v223, %v287
        %v289 = vand.u32 %v188, 4294901760
        %290 = vmatmul.f32.gmra.mxu0 %v289
        %v291 = vpop.f32.mrf.mxu0
        %v292 = vadd.f32 %v231, %v291
        %v293 = vand.u32 %v191, 4294901760
        %294 = vmatmul.f32.gmra.mxu0 %v293
        %v295 = vpop.f32.mrf.mxu0
        %v296 = vadd.f32 %v239, %v295
        %v297 = vand.u32 %v194, 4294901760
        %298 = vmatmul.f32.gmra.mxu0 %v297
        %v299 = vpop.f32.mrf.mxu0
        %v300 = vadd.f32 %v247, %v299
        %301 = vdwg.mxu0
        %302 = vmatpush.msra.mxu0 0.0
        %303 = vmatpush.msra.mxu0 0.0
        %304 = vmatpush.msra.mxu0 0.0
        %305 = vmatpush.msra.mxu0 0.0
        %306 = vmatpush.msra.mxu0 0.0
        %307 = vmatpush.msra.mxu0 0.0
        %308 = vmatpush.msra.mxu0 0.0
        %309 = vmatpush.msra.mxu0 0.0
        %310 = vmatpush.msra.mxu0 0.0
        %311 = vmatpush.msra.mxu0 0.0
        %312 = vmatpush.msra.mxu0 0.0
        %313 = vmatpush.msra.mxu0 0.0
        %v314 = vand.u32 %v182, 4294901760
        %v315 = vsub.f32 %v182, %v314
        %316 = vmatpush.msra.mxu0 %v315
        %v317 = vand.u32 %v181, 4294901760
        %v318 = vsub.f32 %v181, %v317
        %319 = vmatpush.msra.mxu0 %v318
        %v320 = vand.u32 %v180, 4294901760
        %v321 = vsub.f32 %v180, %v320
        %322 = vmatpush.msra.mxu0 %v321
        %v323 = vand.u32 %v179, 4294901760
        %v324 = vsub.f32 %v179, %v323
        %325 = vmatpush.msra.mxu0 %v324
        %v326 = vand.u32 %v185, 4294901760
        %v327 = vsub.f32 %v185, %v326
        %328 = vmatmul.f32.gmra.mxu0 %v327
        %v329 = vpop.f32.mrf.mxu0
        %v330 = vadd.f32 %v288, %v329
        %v331 = vand.u32 %v188, 4294901760
        %v332 = vsub.f32 %v188, %v331
        %333 = vmatmul.f32.gmra.mxu0 %v332
        %v334 = vpop.f32.mrf.mxu0
        %v335 = vadd.f32 %v292, %v334
        %v336 = vand.u32 %v191, 4294901760
        %v337 = vsub.f32 %v191, %v336
        %338 = vmatmul.f32.gmra.mxu0 %v337
        %v339 = vpop.f32.mrf.mxu0
        %v340 = vadd.f32 %v296, %v339
        %v341 = vand.u32 %v194, 4294901760
        %v342 = vsub.f32 %v194, %v341
        %343 = vmatmul.f32.gmra.mxu0 %v342
        %v344 = vpop.f32.mrf.mxu0
        %v345 = vadd.f32 %v300, %v344
        %346 = vdwg.mxu0
        %347 = vmatpush.msra.mxu0 0.0
        %348 = vmatpush.msra.mxu0 0.0
        %349 = vmatpush.msra.mxu0 0.0
        %350 = vmatpush.msra.mxu0 0.0
        %351 = vmatpush.msra.mxu0 0.0
        %352 = vmatpush.msra.mxu0 0.0
        %353 = vmatpush.msra.mxu0 0.0
        %354 = vmatpush.msra.mxu0 0.0
        %355 = vmatpush.msra.mxu0 0.0
        %356 = vmatpush.msra.mxu0 0.0
        %357 = vmatpush.msra.mxu0 0.0
        %358 = vmatpush.msra.mxu0 0.0
        %v359 = vand.u32 %v182, 4294901760
        %360 = vmatpush.msra.mxu0 %v359
        %v361 = vand.u32 %v181, 4294901760
        %362 = vmatpush.msra.mxu0 %v361
        %v363 = vand.u32 %v180, 4294901760
        %364 = vmatpush.msra.mxu0 %v363
        %v365 = vand.u32 %v179, 4294901760
        %366 = vmatpush.msra.mxu0 %v365
        %v367 = vand.u32 %v185, 4294901760
        %v368 = vsub.f32 %v185, %v367
        %v369 = vand.u32 %v368, 4294901760
        %370 = vmatmul.f32.gmra.mxu0 %v369
        %v371 = vpop.f32.mrf.mxu0
        %v372 = vadd.f32 %v330, %v371
        %v373 = vand.u32 %v188, 4294901760
        %v374 = vsub.f32 %v188, %v373
        %v375 = vand.u32 %v374, 4294901760
        %376 = vmatmul.f32.gmra.mxu0 %v375
        %v377 = vpop.f32.mrf.mxu0
        %v378 = vadd.f32 %v335, %v377
        %v379 = vand.u32 %v191, 4294901760
        %v380 = vsub.f32 %v191, %v379
        %v381 = vand.u32 %v380, 4294901760
        %382 = vmatmul.f32.gmra.mxu0 %v381
        %v383 = vpop.f32.mrf.mxu0
        %v384 = vadd.f32 %v340, %v383
        %v385 = vand.u32 %v194, 4294901760
        %v386 = vsub.f32 %v194, %v385
        %v387 = vand.u32 %v386, 4294901760
        %388 = vmatmul.f32.gmra.mxu0 %v387
        %v389 = vpop.f32.mrf.mxu0
        %v390 = vadd.f32 %v345, %v389
        %391 = vdwg.mxu0
        %392 = vmatpush.msra.mxu0 0.0
        %393 = vmatpush.msra.mxu0 0.0
        %394 = vmatpush.msra.mxu0 0.0
        %395 = vmatpush.msra.mxu0 0.0
        %396 = vmatpush.msra.mxu0 0.0
        %397 = vmatpush.msra.mxu0 0.0
        %398 = vmatpush.msra.mxu0 0.0
        %399 = vmatpush.msra.mxu0 0.0
        %400 = vmatpush.msra.mxu0 0.0
        %401 = vmatpush.msra.mxu0 0.0
        %402 = vmatpush.msra.mxu0 0.0
        %403 = vmatpush.msra.mxu0 0.0
        %v404 = vand.u32 %v182, 4294901760
        %v405 = vsub.f32 %v182, %v404
        %v406 = vand.u32 %v405, 4294901760
        %407 = vmatpush.msra.mxu0 %v406
        %v408 = vand.u32 %v181, 4294901760
        %v409 = vsub.f32 %v181, %v408
        %v410 = vand.u32 %v409, 4294901760
        %411 = vmatpush.msra.mxu0 %v410
        %v412 = vand.u32 %v180, 4294901760
        %v413 = vsub.f32 %v180, %v412
        %v414 = vand.u32 %v413, 4294901760
        %415 = vmatpush.msra.mxu0 %v414
        %v416 = vand.u32 %v179, 4294901760
        %v417 = vsub.f32 %v179, %v416
        %v418 = vand.u32 %v417, 4294901760
        %419 = vmatpush.msra.mxu0 %v418
        %v420 = vand.u32 %v185, 4294901760
        %421 = vmatmul.f32.gmra.mxu0 %v420
        %v422 = vpop.f32.mrf.mxu0
        %v423 = vadd.f32 %v372, %v422
        %v424 = vand.u32 %v188, 4294901760
        %425 = vmatmul.f32.gmra.mxu0 %v424
        %v426 = vpop.f32.mrf.mxu0
        %v427 = vadd.f32 %v378, %v426
        %v428 = vand.u32 %v191, 4294901760
        %429 = vmatmul.f32.gmra.mxu0 %v428
        %v430 = vpop.f32.mrf.mxu0
        %v431 = vadd.f32 %v384, %v430
        %v432 = vand.u32 %v194, 4294901760
        %433 = vmatmul.f32.gmra.mxu0 %v432
        %v434 = vpop.f32.mrf.mxu0
        %v435 = vadd.f32 %v390, %v434
        %436 = vdwg.mxu0
        %437 = vmatpush.msra.mxu0 0.0
        %438 = vmatpush.msra.mxu0 0.0
        %439 = vmatpush.msra.mxu0 0.0
        %440 = vmatpush.msra.mxu0 0.0
        %441 = vmatpush.msra.mxu0 0.0
        %442 = vmatpush.msra.mxu0 0.0
        %443 = vmatpush.msra.mxu0 0.0
        %444 = vmatpush.msra.mxu0 0.0
        %445 = vmatpush.msra.mxu0 0.0
        %446 = vmatpush.msra.mxu0 0.0
        %447 = vmatpush.msra.mxu0 0.0
        %448 = vmatpush.msra.mxu0 0.0
        %v449 = vand.u32 %v182, 4294901760
        %450 = vmatpush.msra.mxu0 %v449
        %v451 = vand.u32 %v181, 4294901760
        %452 = vmatpush.msra.mxu0 %v451
        %v453 = vand.u32 %v180, 4294901760
        %454 = vmatpush.msra.mxu0 %v453
        %v455 = vand.u32 %v179, 4294901760
        %456 = vmatpush.msra.mxu0 %v455
        %v457 = vand.u32 %v185, 4294901760
        %458 = vmatmul.f32.gmra.mxu0 %v457
        %v459 = vpop.f32.mrf.mxu0
        %v460 = vadd.f32 %v423, %v459
        %v461 = vand.u32 %v188, 4294901760
        %462 = vmatmul.f32.gmra.mxu0 %v461
        %v463 = vpop.f32.mrf.mxu0
        %v464 = vadd.f32 %v427, %v463
        %v465 = vand.u32 %v191, 4294901760
        %466 = vmatmul.f32.gmra.mxu0 %v465
        %v467 = vpop.f32.mrf.mxu0
        %v468 = vadd.f32 %v431, %v467
        %v469 = vand.u32 %v194, 4294901760
        %470 = vmatmul.f32.gmra.mxu0 %v469
        %v471 = vpop.f32.mrf.mxu0
        %v472 = vadd.f32 %v435, %v471
        %473 = vdwg.mxu0
        %474 = vst [vmem:[#allocation2] sm:$0xff] %v460
        %475 = vst [vmem:[#allocation2 + $0x8] sm:$0xff] %v464
        %476 = vst [vmem:[#allocation2 + $0x10] sm:$0xff] %v468
        %477 = vst [vmem:[#allocation2 + $0x18] sm:$0xff] %v472
        %s478 = scalar_lea.vmem %s172, 32
        %v479 = vld [vmem:[%s478] sm:$0xff]
        %v480 = vld [vmem:[%s478 + $0x8] sm:$0xff]
        %v481 = vld [vmem:[%s478 + $0x10] sm:$0xff]
        %v482 = vld [vmem:[%s478 + $0x18] sm:$0xff]
        %483 = vmatpush.msra.mxu0 0.0
        %484 = vmatpush.msra.mxu0 0.0
        %485 = vmatpush.msra.mxu0 0.0
        %486 = vmatpush.msra.mxu0 0.0
        %487 = vmatpush.msra.mxu0 0.0
        %488 = vmatpush.msra.mxu0 0.0
        %489 = vmatpush.msra.mxu0 0.0
        %490 = vmatpush.msra.mxu0 0.0
        %491 = vmatpush.msra.mxu0 0.0
        %492 = vmatpush.msra.mxu0 0.0
        %493 = vmatpush.msra.mxu0 0.0
        %494 = vmatpush.msra.mxu0 0.0
        %v495 = vand.u32 %v482, 4294901760
        %496 = vmatpush.msra.mxu0 %v495
        %v497 = vand.u32 %v481, 4294901760
        %498 = vmatpush.msra.mxu0 %v497
        %v499 = vand.u32 %v480, 4294901760
        %500 = vmatpush.msra.mxu0 %v499
        %v501 = vand.u32 %v479, 4294901760
        %502 = vmatpush.msra.mxu0 %v501
        %v503 = vand.u32 %v185, 4294901760
        %v504 = vsub.f32 %v185, %v503
        %v505 = vand.u32 %v504, 4294901760
        %v506 = vsub.f32 %v504, %v505
        %v507 = vand.u32 %v506, 4294901760
        %508 = vmatmul.f32.gmra.mxu0 %v507
        %v509 = vpop.f32.mrf.mxu0
        %v510 = vadd.f32 0.0, %v509
        %v511 = vand.u32 %v188, 4294901760
        %v512 = vsub.f32 %v188, %v511
        %v513 = vand.u32 %v512, 4294901760
        %v514 = vsub.f32 %v512, %v513
        %v515 = vand.u32 %v514, 4294901760
        %516 = vmatmul.f32.gmra.mxu0 %v515
        %v517 = vpop.f32.mrf.mxu0
        %v518 = vadd.f32 0.0, %v517
        %v519 = vand.u32 %v191, 4294901760
        %v520 = vsub.f32 %v191, %v519
        %v521 = vand.u32 %v520, 4294901760
        %v522 = vsub.f32 %v520, %v521
        %v523 = vand.u32 %v522, 4294901760
        %524 = vmatmul.f32.gmra.mxu0 %v523
        %v525 = vpop.f32.mrf.mxu0
        %v526 = vadd.f32 0.0, %v525
        %v527 = vand.u32 %v194, 4294901760
        %v528 = vsub.f32 %v194, %v527
        %v529 = vand.u32 %v528, 4294901760
        %v530 = vsub.f32 %v528, %v529
        %v531 = vand.u32 %v530, 4294901760
        %532 = vmatmul.f32.gmra.mxu0 %v531
        %v533 = vpop.f32.mrf.mxu0
        %v534 = vadd.f32 0.0, %v533
        %535 = vdwg.mxu0
        %536 = vmatpush.msra.mxu0 0.0
        %537 = vmatpush.msra.mxu0 0.0
        %538 = vmatpush.msra.mxu0 0.0
        %539 = vmatpush.msra.mxu0 0.0
        %540 = vmatpush.msra.mxu0 0.0
        %541 = vmatpush.msra.mxu0 0.0
        %542 = vmatpush.msra.mxu0 0.0
        %543 = vmatpush.msra.mxu0 0.0
        %544 = vmatpush.msra.mxu0 0.0
        %545 = vmatpush.msra.mxu0 0.0
        %546 = vmatpush.msra.mxu0 0.0
        %547 = vmatpush.msra.mxu0 0.0
        %v548 = vand.u32 %v482, 4294901760
        %v549 = vsub.f32 %v482, %v548
        %v550 = vand.u32 %v549, 4294901760
        %v551 = vsub.f32 %v549, %v550
        %v552 = vand.u32 %v551, 4294901760
        %553 = vmatpush.msra.mxu0 %v552
        %v554 = vand.u32 %v481, 4294901760
        %v555 = vsub.f32 %v481, %v554
        %v556 = vand.u32 %v555, 4294901760
        %v557 = vsub.f32 %v555, %v556
        %v558 = vand.u32 %v557, 4294901760
        %559 = vmatpush.msra.mxu0 %v558
        %v560 = vand.u32 %v480, 4294901760
        %v561 = vsub.f32 %v480, %v560
        %v562 = vand.u32 %v561, 4294901760
        %v563 = vsub.f32 %v561, %v562
        %v564 = vand.u32 %v563, 4294901760
        %565 = vmatpush.msra.mxu0 %v564
        %v566 = vand.u32 %v479, 4294901760
        %v567 = vsub.f32 %v479, %v566
        %v568 = vand.u32 %v567, 4294901760
        %v569 = vsub.f32 %v567, %v568
        %v570 = vand.u32 %v569, 4294901760
        %571 = vmatpush.msra.mxu0 %v570
        %v572 = vand.u32 %v185, 4294901760
        %573 = vmatmul.f32.gmra.mxu0 %v572
        %v574 = vpop.f32.mrf.mxu0
        %v575 = vadd.f32 %v510, %v574
        %v576 = vand.u32 %v188, 4294901760
        %577 = vmatmul.f32.gmra.mxu0 %v576
        %v578 = vpop.f32.mrf.mxu0
        %v579 = vadd.f32 %v518, %v578
        %v580 = vand.u32 %v191, 4294901760
        %581 = vmatmul.f32.gmra.mxu0 %v580
        %v582 = vpop.f32.mrf.mxu0
        %v583 = vadd.f32 %v526, %v582
        %v584 = vand.u32 %v194, 4294901760
        %585 = vmatmul.f32.gmra.mxu0 %v584
        %v586 = vpop.f32.mrf.mxu0
        %v587 = vadd.f32 %v534, %v586
        %588 = vdwg.mxu0
        %589 = vmatpush.msra.mxu0 0.0
        %590 = vmatpush.msra.mxu0 0.0
        %591 = vmatpush.msra.mxu0 0.0
        %592 = vmatpush.msra.mxu0 0.0
        %593 = vmatpush.msra.mxu0 0.0
        %594 = vmatpush.msra.mxu0 0.0
        %595 = vmatpush.msra.mxu0 0.0
        %596 = vmatpush.msra.mxu0 0.0
        %597 = vmatpush.msra.mxu0 0.0
        %598 = vmatpush.msra.mxu0 0.0
        %599 = vmatpush.msra.mxu0 0.0
        %600 = vmatpush.msra.mxu0 0.0
        %v601 = vand.u32 %v482, 4294901760
        %v602 = vsub.f32 %v482, %v601
        %603 = vmatpush.msra.mxu0 %v602
        %v604 = vand.u32 %v481, 4294901760
        %v605 = vsub.f32 %v481, %v604
        %606 = vmatpush.msra.mxu0 %v605
        %v607 = vand.u32 %v480, 4294901760
        %v608 = vsub.f32 %v480, %v607
        %609 = vmatpush.msra.mxu0 %v608
        %v610 = vand.u32 %v479, 4294901760
        %v611 = vsub.f32 %v479, %v610
        %612 = vmatpush.msra.mxu0 %v611
        %v613 = vand.u32 %v185, 4294901760
        %v614 = vsub.f32 %v185, %v613
        %615 = vmatmul.f32.gmra.mxu0 %v614
        %v616 = vpop.f32.mrf.mxu0
        %v617 = vadd.f32 %v575, %v616
        %v618 = vand.u32 %v188, 4294901760
        %v619 = vsub.f32 %v188, %v618
        %620 = vmatmul.f32.gmra.mxu0 %v619
        %v621 = vpop.f32.mrf.mxu0
        %v622 = vadd.f32 %v579, %v621
        %v623 = vand.u32 %v191, 4294901760
        %v624 = vsub.f32 %v191, %v623
        %625 = vmatmul.f32.gmra.mxu0 %v624
        %v626 = vpop.f32.mrf.mxu0
        %v627 = vadd.f32 %v583, %v626
        %v628 = vand.u32 %v194, 4294901760
        %v629 = vsub.f32 %v194, %v628
        %630 = vmatmul.f32.gmra.mxu0 %v629
        %v631 = vpop.f32.mrf.mxu0
        %v632 = vadd.f32 %v587, %v631
        %633 = vdwg.mxu0
        %634 = vmatpush.msra.mxu0 0.0
        %635 = vmatpush.msra.mxu0 0.0
        %636 = vmatpush.msra.mxu0 0.0
        %637 = vmatpush.msra.mxu0 0.0
        %638 = vmatpush.msra.mxu0 0.0
        %639 = vmatpush.msra.mxu0 0.0
        %640 = vmatpush.msra.mxu0 0.0
        %641 = vmatpush.msra.mxu0 0.0
        %642 = vmatpush.msra.mxu0 0.0
        %643 = vmatpush.msra.mxu0 0.0
        %644 = vmatpush.msra.mxu0 0.0
        %645 = vmatpush.msra.mxu0 0.0
        %v646 = vand.u32 %v482, 4294901760
        %647 = vmatpush.msra.mxu0 %v646
        %v648 = vand.u32 %v481, 4294901760
        %649 = vmatpush.msra.mxu0 %v648
        %v650 = vand.u32 %v480, 4294901760
        %651 = vmatpush.msra.mxu0 %v650
        %v652 = vand.u32 %v479, 4294901760
        %653 = vmatpush.msra.mxu0 %v652
        %v654 = vand.u32 %v185, 4294901760
        %v655 = vsub.f32 %v185, %v654
        %v656 = vand.u32 %v655, 4294901760
        %657 = vmatmul.f32.gmra.mxu0 %v656
        %v658 = vpop.f32.mrf.mxu0
        %v659 = vadd.f32 %v617, %v658
        %v660 = vand.u32 %v188, 4294901760
        %v661 = vsub.f32 %v188, %v660
        %v662 = vand.u32 %v661, 4294901760
        %663 = vmatmul.f32.gmra.mxu0 %v662
        %v664 = vpop.f32.mrf.mxu0
        %v665 = vadd.f32 %v622, %v664
        %v666 = vand.u32 %v191, 4294901760
        %v667 = vsub.f32 %v191, %v666
        %v668 = vand.u32 %v667, 4294901760
        %669 = vmatmul.f32.gmra.mxu0 %v668
        %v670 = vpop.f32.mrf.mxu0
        %v671 = vadd.f32 %v627, %v670
        %v672 = vand.u32 %v194, 4294901760
        %v673 = vsub.f32 %v194, %v672
        %v674 = vand.u32 %v673, 4294901760
        %675 = vmatmul.f32.gmra.mxu0 %v674
        %v676 = vpop.f32.mrf.mxu0
        %v677 = vadd.f32 %v632, %v676
        %678 = vdwg.mxu0
        %679 = vmatpush.msra.mxu0 0.0
        %680 = vmatpush.msra.mxu0 0.0
        %681 = vmatpush.msra.mxu0 0.0
        %682 = vmatpush.msra.mxu0 0.0
        %683 = vmatpush.msra.mxu0 0.0
        %684 = vmatpush.msra.mxu0 0.0
        %685 = vmatpush.msra.mxu0 0.0
        %686 = vmatpush.msra.mxu0 0.0
        %687 = vmatpush.msra.mxu0 0.0
        %688 = vmatpush.msra.mxu0 0.0
        %689 = vmatpush.msra.mxu0 0.0
        %690 = vmatpush.msra.mxu0 0.0
        %v691 = vand.u32 %v482, 4294901760
        %v692 = vsub.f32 %v482, %v691
        %v693 = vand.u32 %v692, 4294901760
        %694 = vmatpush.msra.mxu0 %v693
        %v695 = vand.u32 %v481, 4294901760
        %v696 = vsub.f32 %v481, %v695
        %v697 = vand.u32 %v696, 4294901760
        %698 = vmatpush.msra.mxu0 %v697
        %v699 = vand.u32 %v480, 4294901760
        %v700 = vsub.f32 %v480, %v699
        %v701 = vand.u32 %v700, 4294901760
        %702 = vmatpush.msra.mxu0 %v701
        %v703 = vand.u32 %v479, 4294901760
        %v704 = vsub.f32 %v479, %v703
        %v705 = vand.u32 %v704, 4294901760
        %706 = vmatpush.msra.mxu0 %v705
        %v707 = vand.u32 %v185, 4294901760
        %708 = vmatmul.f32.gmra.mxu0 %v707
        %v709 = vpop.f32.mrf.mxu0
        %v710 = vadd.f32 %v659, %v709
        %v711 = vand.u32 %v188, 4294901760
        %712 = vmatmul.f32.gmra.mxu0 %v711
        %v713 = vpop.f32.mrf.mxu0
        %v714 = vadd.f32 %v665, %v713
        %v715 = vand.u32 %v191, 4294901760
        %716 = vmatmul.f32.gmra.mxu0 %v715
        %v717 = vpop.f32.mrf.mxu0
        %v718 = vadd.f32 %v671, %v717
        %v719 = vand.u32 %v194, 4294901760
        %720 = vmatmul.f32.gmra.mxu0 %v719
        %v721 = vpop.f32.mrf.mxu0
        %v722 = vadd.f32 %v677, %v721
        %723 = vdwg.mxu0
        %724 = vmatpush.msra.mxu0 0.0
        %725 = vmatpush.msra.mxu0 0.0
        %726 = vmatpush.msra.mxu0 0.0
        %727 = vmatpush.msra.mxu0 0.0
        %728 = vmatpush.msra.mxu0 0.0
        %729 = vmatpush.msra.mxu0 0.0
        %730 = vmatpush.msra.mxu0 0.0
        %731 = vmatpush.msra.mxu0 0.0
        %732 = vmatpush.msra.mxu0 0.0
        %733 = vmatpush.msra.mxu0 0.0
        %734 = vmatpush.msra.mxu0 0.0
        %735 = vmatpush.msra.mxu0 0.0
        %v736 = vand.u32 %v482, 4294901760
        %737 = vmatpush.msra.mxu0 %v736
        %v738 = vand.u32 %v481, 4294901760
        %739 = vmatpush.msra.mxu0 %v738
        %v740 = vand.u32 %v480, 4294901760
        %741 = vmatpush.msra.mxu0 %v740
        %v742 = vand.u32 %v479, 4294901760
        %743 = vmatpush.msra.mxu0 %v742
        %v744 = vand.u32 %v185, 4294901760
        %745 = vmatmul.f32.gmra.mxu0 %v744
        %v746 = vpop.f32.mrf.mxu0
        %v747 = vadd.f32 %v710, %v746
        %v748 = vand.u32 %v188, 4294901760
        %749 = vmatmul.f32.gmra.mxu0 %v748
        %v750 = vpop.f32.mrf.mxu0
        %v751 = vadd.f32 %v714, %v750
        %v752 = vand.u32 %v191, 4294901760
        %753 = vmatmul.f32.gmra.mxu0 %v752
        %v754 = vpop.f32.mrf.mxu0
        %v755 = vadd.f32 %v718, %v754
        %v756 = vand.u32 %v194, 4294901760
        %757 = vmatmul.f32.gmra.mxu0 %v756
        %v758 = vpop.f32.mrf.mxu0
        %v759 = vadd.f32 %v722, %v758
        %760 = vdwg.mxu0
        %761 = vst [vmem:[#allocation2 + $0x20] sm:$0xff] %v747
        %762 = vst [vmem:[#allocation2 + $0x28] sm:$0xff] %v751
        %763 = vst [vmem:[#allocation2 + $0x30] sm:$0xff] %v755
        %764 = vst [vmem:[#allocation2 + $0x38] sm:$0xff] %v759
        %v765 = vld [vmem:[#allocation2] sm:$0xff]
        %v766 = vld [vmem:[#allocation2 + $0x8] sm:$0xff]
        %v767 = vld [vmem:[#allocation2 + $0x10] sm:$0xff]
        %v768 = vld [vmem:[#allocation2 + $0x18] sm:$0xff]
        %v769 = vld [vmem:[#allocation2 + $0x20] sm:$0xff]
        %v770 = vld [vmem:[#allocation2 + $0x28] sm:$0xff]
        %v771 = vld [vmem:[#allocation2 + $0x30] sm:$0xff]
        %v772 = vld [vmem:[#allocation2 + $0x38] sm:$0xff]
        %v773 = vld [vmem:[%s2] sm:$0xff]
        %v774 = vld [vmem:[%s2 + $0x8] sm:$0xff]
        %v775 = vld [vmem:[%s2 + $0x10] sm:$0xff]
        %v776 = vld [vmem:[%s2 + $0x18] sm:$0xff]
        %v777 = vld [vmem:[%s2 + $0x20] sm:$0xff]
        %v778 = vld [vmem:[%s2 + $0x28] sm:$0xff]
        %v779 = vld [vmem:[%s2 + $0x30] sm:$0xff]
        %v780 = vld [vmem:[%s2 + $0x38] sm:$0xff]
        %v781 = vld [vmem:[%s2 + $0x40] sm:$0xff]
        %v782 = vld [vmem:[%s2 + $0x48] sm:$0xff]
        %v783 = vld [vmem:[%s2 + $0x50] sm:$0xff]
        %v784 = vld [vmem:[%s2 + $0x58] sm:$0xff]
        %v785 = vld [vmem:[%s2 + $0x60] sm:$0xff]
        %v786 = vld [vmem:[%s2 + $0x68] sm:$0xff]
        %v787 = vld [vmem:[%s2 + $0x70] sm:$0xff]
        %v788 = vld [vmem:[%s2 + $0x78] sm:$0xff]
        %v789 = vld [vmem:[%s2 + $0x80] sm:$0xff]
        %v790 = vld [vmem:[%s2 + $0x88] sm:$0xff]
        %v791 = vld [vmem:[%s2 + $0x90] sm:$0xff]
        %v792 = vld [vmem:[%s2 + $0x98] sm:$0xff]
        %v793 = vld [vmem:[%s2 + $0xa0] sm:$0xff]
        %v794 = vld [vmem:[%s2 + $0xa8] sm:$0xff]
        %v795 = vld [vmem:[%s2 + $0xb0] sm:$0xff]
        %v796 = vld [vmem:[%s2 + $0xb8] sm:$0xff]
        %v797 = vld [vmem:[%s2 + $0xc0] sm:$0xff]
        %v798 = vld [vmem:[%s2 + $0xc8] sm:$0xff]
        %v799 = vld [vmem:[%s2 + $0xd0] sm:$0xff]
        %v800 = vld [vmem:[%s2 + $0xd8] sm:$0xff]
        %v801 = vld [vmem:[%s2 + $0xe0] sm:$0xff]
        %v802 = vld [vmem:[%s2 + $0xe8] sm:$0xff]
        %v803 = vld [vmem:[%s2 + $0xf0] sm:$0xff]
        %v804 = vld [vmem:[%s2 + $0xf8] sm:$0xff]
        %v805 = vand.u32 %v803, 4294901760
        %806 = vmatpush.msra.mxu0 %v805
        %v807 = vand.u32 %v801, 4294901760
        %808 = vmatpush.msra.mxu0 %v807
        %v809 = vand.u32 %v799, 4294901760
        %810 = vmatpush.msra.mxu0 %v809
        %v811 = vand.u32 %v797, 4294901760
        %812 = vmatpush.msra.mxu0 %v811
        %v813 = vand.u32 %v795, 4294901760
        %814 = vmatpush.msra.mxu0 %v813
        %v815 = vand.u32 %v793, 4294901760
        %816 = vmatpush.msra.mxu0 %v815
        %v817 = vand.u32 %v791, 4294901760
        %818 = vmatpush.msra.mxu0 %v817
        %v819 = vand.u32 %v789, 4294901760
        %820 = vmatpush.msra.mxu0 %v819
        %v821 = vand.u32 %v787, 4294901760
        %822 = vmatpush.msra.mxu0 %v821
        %v823 = vand.u32 %v785, 4294901760
        %824 = vmatpush.msra.mxu0 %v823
        %v825 = vand.u32 %v783, 4294901760
        %826 = vmatpush.msra.mxu0 %v825
        %v827 = vand.u32 %v781, 4294901760
        %828 = vmatpush.msra.mxu0 %v827
        %v829 = vand.u32 %v779, 4294901760
        %830 = vmatpush.msra.mxu0 %v829
        %v831 = vand.u32 %v777, 4294901760
        %832 = vmatpush.msra.mxu0 %v831
        %v833 = vand.u32 %v775, 4294901760
        %834 = vmatpush.msra.mxu0 %v833
        %v835 = vand.u32 %v773, 4294901760
        %836 = vmatpush.msra.mxu0 %v835
        %v837 = vand.u32 %v765, 4294901760
        %v838 = vsub.f32 %v765, %v837
        %v839 = vand.u32 %v838, 4294901760
        %v840 = vsub.f32 %v838, %v839
        %v841 = vand.u32 %v840, 4294901760
        %842 = vmatmul.f32.gmra.mxu0 %v841
        %v843 = vpop.f32.mrf.mxu0
        %v844 = vadd.f32 0.0, %v843
        %v845 = vand.u32 %v766, 4294901760
        %v846 = vsub.f32 %v766, %v845
        %v847 = vand.u32 %v846, 4294901760
        %v848 = vsub.f32 %v846, %v847
        %v849 = vand.u32 %v848, 4294901760
        %850 = vmatmul.f32.gmra.mxu0 %v849
        %v851 = vpop.f32.mrf.mxu0
        %v852 = vadd.f32 0.0, %v851
        %v853 = vand.u32 %v767, 4294901760
        %v854 = vsub.f32 %v767, %v853
        %v855 = vand.u32 %v854, 4294901760
        %v856 = vsub.f32 %v854, %v855
        %v857 = vand.u32 %v856, 4294901760
        %858 = vmatmul.f32.gmra.mxu0 %v857
        %v859 = vpop.f32.mrf.mxu0
        %v860 = vadd.f32 0.0, %v859
        %v861 = vand.u32 %v768, 4294901760
        %v862 = vsub.f32 %v768, %v861
        %v863 = vand.u32 %v862, 4294901760
        %v864 = vsub.f32 %v862, %v863
        %v865 = vand.u32 %v864, 4294901760
        %866 = vmatmul.f32.gmra.mxu0 %v865
        %v867 = vpop.f32.mrf.mxu0
        %v868 = vadd.f32 0.0, %v867
        %v869 = vand.u32 %v769, 4294901760
        %v870 = vsub.f32 %v769, %v869
        %v871 = vand.u32 %v870, 4294901760
        %v872 = vsub.f32 %v870, %v871
        %v873 = vand.u32 %v872, 4294901760
        %874 = vmatmul.f32.gmra.mxu0 %v873
        %v875 = vpop.f32.mrf.mxu0
        %v876 = vadd.f32 0.0, %v875
        %v877 = vand.u32 %v770, 4294901760
        %v878 = vsub.f32 %v770, %v877
        %v879 = vand.u32 %v878, 4294901760
        %v880 = vsub.f32 %v878, %v879
        %v881 = vand.u32 %v880, 4294901760
        %882 = vmatmul.f32.gmra.mxu0 %v881
        %v883 = vpop.f32.mrf.mxu0
        %v884 = vadd.f32 0.0, %v883
        %v885 = vand.u32 %v771, 4294901760
        %v886 = vsub.f32 %v771, %v885
        %v887 = vand.u32 %v886, 4294901760
        %v888 = vsub.f32 %v886, %v887
        %v889 = vand.u32 %v888, 4294901760
        %890 = vmatmul.f32.gmra.mxu0 %v889
        %v891 = vpop.f32.mrf.mxu0
        %v892 = vadd.f32 0.0, %v891
        %v893 = vand.u32 %v772, 4294901760
        %v894 = vsub.f32 %v772, %v893
        %v895 = vand.u32 %v894, 4294901760
        %v896 = vsub.f32 %v894, %v895
        %v897 = vand.u32 %v896, 4294901760
        %898 = vmatmul.f32.gmra.mxu0 %v897
        %v899 = vpop.f32.mrf.mxu0
        %v900 = vadd.f32 0.0, %v899
        %901 = vdwg.mxu0
        %v902 = vand.u32 %v803, 4294901760
        %v903 = vsub.f32 %v803, %v902
        %v904 = vand.u32 %v903, 4294901760
        %v905 = vsub.f32 %v903, %v904
        %v906 = vand.u32 %v905, 4294901760
        %907 = vmatpush.msra.mxu0 %v906
        %v908 = vand.u32 %v801, 4294901760
        %v909 = vsub.f32 %v801, %v908
        %v910 = vand.u32 %v909, 4294901760
        %v911 = vsub.f32 %v909, %v910
        %v912 = vand.u32 %v911, 4294901760
        %913 = vmatpush.msra.mxu0 %v912
        %v914 = vand.u32 %v799, 4294901760
        %v915 = vsub.f32 %v799, %v914
        %v916 = vand.u32 %v915, 4294901760
        %v917 = vsub.f32 %v915, %v916
        %v918 = vand.u32 %v917, 4294901760
        %919 = vmatpush.msra.mxu0 %v918
        %v920 = vand.u32 %v797, 4294901760
        %v921 = vsub.f32 %v797, %v920
        %v922 = vand.u32 %v921, 4294901760
        %v923 = vsub.f32 %v921, %v922
        %v924 = vand.u32 %v923, 4294901760
        %925 = vmatpush.msra.mxu0 %v924
        %v926 = vand.u32 %v795, 4294901760
        %v927 = vsub.f32 %v795, %v926
        %v928 = vand.u32 %v927, 4294901760
        %v929 = vsub.f32 %v927, %v928
        %v930 = vand.u32 %v929, 4294901760
        %931 = vmatpush.msra.mxu0 %v930
        %v932 = vand.u32 %v793, 4294901760
        %v933 = vsub.f32 %v793, %v932
        %v934 = vand.u32 %v933, 4294901760
        %v935 = vsub.f32 %v933, %v934
        %v936 = vand.u32 %v935, 4294901760
        %937 = vmatpush.msra.mxu0 %v936
        %v938 = vand.u32 %v791, 4294901760
        %v939 = vsub.f32 %v791, %v938
        %v940 = vand.u32 %v939, 4294901760
        %v941 = vsub.f32 %v939, %v940
        %v942 = vand.u32 %v941, 4294901760
        %943 = vmatpush.msra.mxu0 %v942
        %v944 = vand.u32 %v789, 4294901760
        %v945 = vsub.f32 %v789, %v944
        %v946 = vand.u32 %v945, 4294901760
        %v947 = vsub.f32 %v945, %v946
        %v948 = vand.u32 %v947, 4294901760
        %949 = vmatpush.msra.mxu0 %v948
        %v950 = vand.u32 %v787, 4294901760
        %v951 = vsub.f32 %v787, %v950
        %v952 = vand.u32 %v951, 4294901760
        %v953 = vsub.f32 %v951, %v952
        %v954 = vand.u32 %v953, 4294901760
        %955 = vmatpush.msra.mxu0 %v954
        %v956 = vand.u32 %v785, 4294901760
        %v957 = vsub.f32 %v785, %v956
        %v958 = vand.u32 %v957, 4294901760
        %v959 = vsub.f32 %v957, %v958
        %v960 = vand.u32 %v959, 4294901760
        %961 = vmatpush.msra.mxu0 %v960
        %v962 = vand.u32 %v783, 4294901760
        %v963 = vsub.f32 %v783, %v962
        %v964 = vand.u32 %v963, 4294901760
        %v965 = vsub.f32 %v963, %v964
        %v966 = vand.u32 %v965, 4294901760
        %967 = vmatpush.msra.mxu0 %v966
        %v968 = vand.u32 %v781, 4294901760
        %v969 = vsub.f32 %v781, %v968
        %v970 = vand.u32 %v969, 4294901760
        %v971 = vsub.f32 %v969, %v970
        %v972 = vand.u32 %v971, 4294901760
        %973 = vmatpush.msra.mxu0 %v972
        %v974 = vand.u32 %v779, 4294901760
        %v975 = vsub.f32 %v779, %v974
        %v976 = vand.u32 %v975, 4294901760
        %v977 = vsub.f32 %v975, %v976
        %v978 = vand.u32 %v977, 4294901760
        %979 = vmatpush.msra.mxu0 %v978
        %v980 = vand.u32 %v777, 4294901760
        %v981 = vsub.f32 %v777, %v980
        %v982 = vand.u32 %v981, 4294901760
        %v983 = vsub.f32 %v981, %v982
        %v984 = vand.u32 %v983, 4294901760
        %985 = vmatpush.msra.mxu0 %v984
        %v986 = vand.u32 %v775, 4294901760
        %v987 = vsub.f32 %v775, %v986
        %v988 = vand.u32 %v987, 4294901760
        %v989 = vsub.f32 %v987, %v988
        %v990 = vand.u32 %v989, 4294901760
        %991 = vmatpush.msra.mxu0 %v990
        %v992 = vand.u32 %v773, 4294901760
        %v993 = vsub.f32 %v773, %v992
        %v994 = vand.u32 %v993, 4294901760
        %v995 = vsub.f32 %v993, %v994
        %v996 = vand.u32 %v995, 4294901760
        %997 = vmatpush.msra.mxu0 %v996
        %v998 = vand.u32 %v765, 4294901760
        %999 = vmatmul.f32.gmra.mxu0 %v998
        %v1000 = vpop.f32.mrf.mxu0
        %v1001 = vadd.f32 %v844, %v1000
        %v1002 = vand.u32 %v766, 4294901760
        %1003 = vmatmul.f32.gmra.mxu0 %v1002
        %v1004 = vpop.f32.mrf.mxu0
        %v1005 = vadd.f32 %v852, %v1004
        %v1006 = vand.u32 %v767, 4294901760
        %1007 = vmatmul.f32.gmra.mxu0 %v1006
        %v1008 = vpop.f32.mrf.mxu0
        %v1009 = vadd.f32 %v860, %v1008
        %v1010 = vand.u32 %v768, 4294901760
        %1011 = vmatmul.f32.gmra.mxu0 %v1010
        %v1012 = vpop.f32.mrf.mxu0
        %v1013 = vadd.f32 %v868, %v1012
        %v1014 = vand.u32 %v769, 4294901760
        %1015 = vmatmul.f32.gmra.mxu0 %v1014
        %v1016 = vpop.f32.mrf.mxu0
        %v1017 = vadd.f32 %v876, %v1016
        %v1018 = vand.u32 %v770, 4294901760
        %1019 = vmatmul.f32.gmra.mxu0 %v1018
        %v1020 = vpop.f32.mrf.mxu0
        %v1021 = vadd.f32 %v884, %v1020
        %v1022 = vand.u32 %v771, 4294901760
        %1023 = vmatmul.f32.gmra.mxu0 %v1022
        %v1024 = vpop.f32.mrf.mxu0
        %v1025 = vadd.f32 %v892, %v1024
        %v1026 = vand.u32 %v772, 4294901760
        %1027 = vmatmul.f32.gmra.mxu0 %v1026
        %v1028 = vpop.f32.mrf.mxu0
        %v1029 = vadd.f32 %v900, %v1028
        %1030 = vdwg.mxu0
        %v1031 = vand.u32 %v803, 4294901760
        %v1032 = vsub.f32 %v803, %v1031
        %1033 = vmatpush.msra.mxu0 %v1032
        %v1034 = vand.u32 %v801, 4294901760
        %v1035 = vsub.f32 %v801, %v1034
        %1036 = vmatpush.msra.mxu0 %v1035
        %v1037 = vand.u32 %v799, 4294901760
        %v1038 = vsub.f32 %v799, %v1037
        %1039 = vmatpush.msra.mxu0 %v1038
        %v1040 = vand.u32 %v797, 4294901760
        %v1041 = vsub.f32 %v797, %v1040
        %1042 = vmatpush.msra.mxu0 %v1041
        %v1043 = vand.u32 %v795, 4294901760
        %v1044 = vsub.f32 %v795, %v1043
        %1045 = vmatpush.msra.mxu0 %v1044
        %v1046 = vand.u32 %v793, 4294901760
        %v1047 = vsub.f32 %v793, %v1046
        %1048 = vmatpush.msra.mxu0 %v1047
        %v1049 = vand.u32 %v791, 4294901760
        %v1050 = vsub.f32 %v791, %v1049
        %1051 = vmatpush.msra.mxu0 %v1050
        %v1052 = vand.u32 %v789, 4294901760
        %v1053 = vsub.f32 %v789, %v1052
        %1054 = vmatpush.msra.mxu0 %v1053
        %v1055 = vand.u32 %v787, 4294901760
        %v1056 = vsub.f32 %v787, %v1055
        %1057 = vmatpush.msra.mxu0 %v1056
        %v1058 = vand.u32 %v785, 4294901760
        %v1059 = vsub.f32 %v785, %v1058
        %1060 = vmatpush.msra.mxu0 %v1059
        %v1061 = vand.u32 %v783, 4294901760
        %v1062 = vsub.f32 %v783, %v1061
        %1063 = vmatpush.msra.mxu0 %v1062
        %v1064 = vand.u32 %v781, 4294901760
        %v1065 = vsub.f32 %v781, %v1064
        %1066 = vmatpush.msra.mxu0 %v1065
        %v1067 = vand.u32 %v779, 4294901760
        %v1068 = vsub.f32 %v779, %v1067
        %1069 = vmatpush.msra.mxu0 %v1068
        %v1070 = vand.u32 %v777, 4294901760
        %v1071 = vsub.f32 %v777, %v1070
        %1072 = vmatpush.msra.mxu0 %v1071
        %v1073 = vand.u32 %v775, 4294901760
        %v1074 = vsub.f32 %v775, %v1073
        %1075 = vmatpush.msra.mxu0 %v1074
        %v1076 = vand.u32 %v773, 4294901760
        %v1077 = vsub.f32 %v773, %v1076
        %1078 = vmatpush.msra.mxu0 %v1077
        %v1079 = vand.u32 %v765, 4294901760
        %v1080 = vsub.f32 %v765, %v1079
        %1081 = vmatmul.f32.gmra.mxu0 %v1080
        %v1082 = vpop.f32.mrf.mxu0
        %v1083 = vadd.f32 %v1001, %v1082
        %v1084 = vand.u32 %v766, 4294901760
        %v1085 = vsub.f32 %v766, %v1084
        %1086 = vmatmul.f32.gmra.mxu0 %v1085
        %v1087 = vpop.f32.mrf.mxu0
        %v1088 = vadd.f32 %v1005, %v1087
        %v1089 = vand.u32 %v767, 4294901760
        %v1090 = vsub.f32 %v767, %v1089
        %1091 = vmatmul.f32.gmra.mxu0 %v1090
        %v1092 = vpop.f32.mrf.mxu0
        %v1093 = vadd.f32 %v1009, %v1092
        %v1094 = vand.u32 %v768, 4294901760
        %v1095 = vsub.f32 %v768, %v1094
        %1096 = vmatmul.f32.gmra.mxu0 %v1095
        %v1097 = vpop.f32.mrf.mxu0
        %v1098 = vadd.f32 %v1013, %v1097
        %v1099 = vand.u32 %v769, 4294901760
        %v1100 = vsub.f32 %v769, %v1099
        %1101 = vmatmul.f32.gmra.mxu0 %v1100
        %v1102 = vpop.f32.mrf.mxu0
        %v1103 = vadd.f32 %v1017, %v1102
        %v1104 = vand.u32 %v770, 4294901760
        %v1105 = vsub.f32 %v770, %v1104
        %1106 = vmatmul.f32.gmra.mxu0 %v1105
        %v1107 = vpop.f32.mrf.mxu0
        %v1108 = vadd.f32 %v1021, %v1107
        %v1109 = vand.u32 %v771, 4294901760
        %v1110 = vsub.f32 %v771, %v1109
        %1111 = vmatmul.f32.gmra.mxu0 %v1110
        %v1112 = vpop.f32.mrf.mxu0
        %v1113 = vadd.f32 %v1025, %v1112
        %v1114 = vand.u32 %v772, 4294901760
        %v1115 = vsub.f32 %v772, %v1114
        %1116 = vmatmul.f32.gmra.mxu0 %v1115
        %v1117 = vpop.f32.mrf.mxu0
        %v1118 = vadd.f32 %v1029, %v1117
        %1119 = vdwg.mxu0
        %v1120 = vand.u32 %v803, 4294901760
        %1121 = vmatpush.msra.mxu0 %v1120
        %v1122 = vand.u32 %v801, 4294901760
        %1123 = vmatpush.msra.mxu0 %v1122
        %v1124 = vand.u32 %v799, 4294901760
        %1125 = vmatpush.msra.mxu0 %v1124
        %v1126 = vand.u32 %v797, 4294901760
        %1127 = vmatpush.msra.mxu0 %v1126
        %v1128 = vand.u32 %v795, 4294901760
        %1129 = vmatpush.msra.mxu0 %v1128
        %v1130 = vand.u32 %v793, 4294901760
        %1131 = vmatpush.msra.mxu0 %v1130
        %v1132 = vand.u32 %v791, 4294901760
        %1133 = vmatpush.msra.mxu0 %v1132
        %v1134 = vand.u32 %v789, 4294901760
        %1135 = vmatpush.msra.mxu0 %v1134
        %v1136 = vand.u32 %v787, 4294901760
        %1137 = vmatpush.msra.mxu0 %v1136
        %v1138 = vand.u32 %v785, 4294901760
        %1139 = vmatpush.msra.mxu0 %v1138
        %v1140 = vand.u32 %v783, 4294901760
        %1141 = vmatpush.msra.mxu0 %v1140
        %v1142 = vand.u32 %v781, 4294901760
        %1143 = vmatpush.msra.mxu0 %v1142
        %v1144 = vand.u32 %v779, 4294901760
        %1145 = vmatpush.msra.mxu0 %v1144
        %v1146 = vand.u32 %v777, 4294901760
        %1147 = vmatpush.msra.mxu0 %v1146
        %v1148 = vand.u32 %v775, 4294901760
        %1149 = vmatpush.msra.mxu0 %v1148
        %v1150 = vand.u32 %v773, 4294901760
        %1151 = vmatpush.msra.mxu0 %v1150
        %v1152 = vand.u32 %v765, 4294901760
        %v1153 = vsub.f32 %v765, %v1152
        %v1154 = vand.u32 %v1153, 4294901760
        %1155 = vmatmul.f32.gmra.mxu0 %v1154
        %v1156 = vpop.f32.mrf.mxu0
        %v1157 = vadd.f32 %v1083, %v1156
        %v1158 = vand.u32 %v766, 4294901760
        %v1159 = vsub.f32 %v766, %v1158
        %v1160 = vand.u32 %v1159, 4294901760
        %1161 = vmatmul.f32.gmra.mxu0 %v1160
        %v1162 = vpop.f32.mrf.mxu0
        %v1163 = vadd.f32 %v1088, %v1162
        %v1164 = vand.u32 %v767, 4294901760
        %v1165 = vsub.f32 %v767, %v1164
        %v1166 = vand.u32 %v1165, 4294901760
        %1167 = vmatmul.f32.gmra.mxu0 %v1166
        %v1168 = vpop.f32.mrf.mxu0
        %v1169 = vadd.f32 %v1093, %v1168
        %v1170 = vand.u32 %v768, 4294901760
        %v1171 = vsub.f32 %v768, %v1170
        %v1172 = vand.u32 %v1171, 4294901760
        %1173 = vmatmul.f32.gmra.mxu0 %v1172
        %v1174 = vpop.f32.mrf.mxu0
        %v1175 = vadd.f32 %v1098, %v1174
        %v1176 = vand.u32 %v769, 4294901760
        %v1177 = vsub.f32 %v769, %v1176
        %v1178 = vand.u32 %v1177, 4294901760
        %1179 = vmatmul.f32.gmra.mxu0 %v1178
        %v1180 = vpop.f32.mrf.mxu0
        %v1181 = vadd.f32 %v1103, %v1180
        %v1182 = vand.u32 %v770, 4294901760
        %v1183 = vsub.f32 %v770, %v1182
        %v1184 = vand.u32 %v1183, 4294901760
        %1185 = vmatmul.f32.gmra.mxu0 %v1184
        %v1186 = vpop.f32.mrf.mxu0
        %v1187 = vadd.f32 %v1108, %v1186
        %v1188 = vand.u32 %v771, 4294901760
        %v1189 = vsub.f32 %v771, %v1188
        %v1190 = vand.u32 %v1189, 4294901760
        %1191 = vmatmul.f32.gmra.mxu0 %v1190
        %v1192 = vpop.f32.mrf.mxu0
        %v1193 = vadd.f32 %v1113, %v1192
        %v1194 = vand.u32 %v772, 4294901760
        %v1195 = vsub.f32 %v772, %v1194
        %v1196 = vand.u32 %v1195, 4294901760
        %1197 = vmatmul.f32.gmra.mxu0 %v1196
        %v1198 = vpop.f32.mrf.mxu0
        %v1199 = vadd.f32 %v1118, %v1198
        %1200 = vdwg.mxu0
        %v1201 = vand.u32 %v803, 4294901760
        %v1202 = vsub.f32 %v803, %v1201
        %v1203 = vand.u32 %v1202, 4294901760
        %1204 = vmatpush.msra.mxu0 %v1203
        %v1205 = vand.u32 %v801, 4294901760
        %v1206 = vsub.f32 %v801, %v1205
        %v1207 = vand.u32 %v1206, 4294901760
        %1208 = vmatpush.msra.mxu0 %v1207
        %v1209 = vand.u32 %v799, 4294901760
        %v1210 = vsub.f32 %v799, %v1209
        %v1211 = vand.u32 %v1210, 4294901760
        %1212 = vmatpush.msra.mxu0 %v1211
        %v1213 = vand.u32 %v797, 4294901760
        %v1214 = vsub.f32 %v797, %v1213
        %v1215 = vand.u32 %v1214, 4294901760
        %1216 = vmatpush.msra.mxu0 %v1215
        %v1217 = vand.u32 %v795, 4294901760
        %v1218 = vsub.f32 %v795, %v1217
        %v1219 = vand.u32 %v1218, 4294901760
        %1220 = vmatpush.msra.mxu0 %v1219
        %v1221 = vand.u32 %v793, 4294901760
        %v1222 = vsub.f32 %v793, %v1221
        %v1223 = vand.u32 %v1222, 4294901760
        %1224 = vmatpush.msra.mxu0 %v1223
        %v1225 = vand.u32 %v791, 4294901760
        %v1226 = vsub.f32 %v791, %v1225
        %v1227 = vand.u32 %v1226, 4294901760
        %1228 = vmatpush.msra.mxu0 %v1227
        %v1229 = vand.u32 %v789, 4294901760
        %v1230 = vsub.f32 %v789, %v1229
        %v1231 = vand.u32 %v1230, 4294901760
        %1232 = vmatpush.msra.mxu0 %v1231
        %v1233 = vand.u32 %v787, 4294901760
        %v1234 = vsub.f32 %v787, %v1233
        %v1235 = vand.u32 %v1234, 4294901760
        %1236 = vmatpush.msra.mxu0 %v1235
        %v1237 = vand.u32 %v785, 4294901760
        %v1238 = vsub.f32 %v785, %v1237
        %v1239 = vand.u32 %v1238, 4294901760
        %1240 = vmatpush.msra.mxu0 %v1239
        %v1241 = vand.u32 %v783, 4294901760
        %v1242 = vsub.f32 %v783, %v1241
        %v1243 = vand.u32 %v1242, 4294901760
        %1244 = vmatpush.msra.mxu0 %v1243
        %v1245 = vand.u32 %v781, 4294901760
        %v1246 = vsub.f32 %v781, %v1245
        %v1247 = vand.u32 %v1246, 4294901760
        %1248 = vmatpush.msra.mxu0 %v1247
        %v1249 = vand.u32 %v779, 4294901760
        %v1250 = vsub.f32 %v779, %v1249
        %v1251 = vand.u32 %v1250, 4294901760
        %1252 = vmatpush.msra.mxu0 %v1251
        %v1253 = vand.u32 %v777, 4294901760
        %v1254 = vsub.f32 %v777, %v1253
        %v1255 = vand.u32 %v1254, 4294901760
        %1256 = vmatpush.msra.mxu0 %v1255
        %v1257 = vand.u32 %v775, 4294901760
        %v1258 = vsub.f32 %v775, %v1257
        %v1259 = vand.u32 %v1258, 4294901760
        %1260 = vmatpush.msra.mxu0 %v1259
        %v1261 = vand.u32 %v773, 4294901760
        %v1262 = vsub.f32 %v773, %v1261
        %v1263 = vand.u32 %v1262, 4294901760
        %1264 = vmatpush.msra.mxu0 %v1263
        %v1265 = vand.u32 %v765, 4294901760
        %1266 = vmatmul.f32.gmra.mxu0 %v1265
        %v1267 = vpop.f32.mrf.mxu0
        %v1268 = vadd.f32 %v1157, %v1267
        %v1269 = vand.u32 %v766, 4294901760
        %1270 = vmatmul.f32.gmra.mxu0 %v1269
        %v1271 = vpop.f32.mrf.mxu0
        %v1272 = vadd.f32 %v1163, %v1271
        %v1273 = vand.u32 %v767, 4294901760
        %1274 = vmatmul.f32.gmra.mxu0 %v1273
        %v1275 = vpop.f32.mrf.mxu0
        %v1276 = vadd.f32 %v1169, %v1275
        %v1277 = vand.u32 %v768, 4294901760
        %1278 = vmatmul.f32.gmra.mxu0 %v1277
        %v1279 = vpop.f32.mrf.mxu0
        %v1280 = vadd.f32 %v1175, %v1279
        %v1281 = vand.u32 %v769, 4294901760
        %1282 = vmatmul.f32.gmra.mxu0 %v1281
        %v1283 = vpop.f32.mrf.mxu0
        %v1284 = vadd.f32 %v1181, %v1283
        %v1285 = vand.u32 %v770, 4294901760
        %1286 = vmatmul.f32.gmra.mxu0 %v1285
        %v1287 = vpop.f32.mrf.mxu0
        %v1288 = vadd.f32 %v1187, %v1287
        %v1289 = vand.u32 %v771, 4294901760
        %1290 = vmatmul.f32.gmra.mxu0 %v1289
        %v1291 = vpop.f32.mrf.mxu0
        %v1292 = vadd.f32 %v1193, %v1291
        %v1293 = vand.u32 %v772, 4294901760
        %1294 = vmatmul.f32.gmra.mxu0 %v1293
        %v1295 = vpop.f32.mrf.mxu0
        %v1296 = vadd.f32 %v1199, %v1295
        %1297 = vdwg.mxu0
        %v1298 = vand.u32 %v803, 4294901760
        %1299 = vmatpush.msra.mxu0 %v1298
        %v1300 = vand.u32 %v801, 4294901760
        %1301 = vmatpush.msra.mxu0 %v1300
        %v1302 = vand.u32 %v799, 4294901760
        %1303 = vmatpush.msra.mxu0 %v1302
        %v1304 = vand.u32 %v797, 4294901760
        %1305 = vmatpush.msra.mxu0 %v1304
        %v1306 = vand.u32 %v795, 4294901760
        %1307 = vmatpush.msra.mxu0 %v1306
        %v1308 = vand.u32 %v793, 4294901760
        %1309 = vmatpush.msra.mxu0 %v1308
        %v1310 = vand.u32 %v791, 4294901760
        %1311 = vmatpush.msra.mxu0 %v1310
        %v1312 = vand.u32 %v789, 4294901760
        %1313 = vmatpush.msra.mxu0 %v1312
        %v1314 = vand.u32 %v787, 4294901760
        %1315 = vmatpush.msra.mxu0 %v1314
        %v1316 = vand.u32 %v785, 4294901760
        %1317 = vmatpush.msra.mxu0 %v1316
        %v1318 = vand.u32 %v783, 4294901760
        %1319 = vmatpush.msra.mxu0 %v1318
        %v1320 = vand.u32 %v781, 4294901760
        %1321 = vmatpush.msra.mxu0 %v1320
        %v1322 = vand.u32 %v779, 4294901760
        %1323 = vmatpush.msra.mxu0 %v1322
        %v1324 = vand.u32 %v777, 4294901760
        %1325 = vmatpush.msra.mxu0 %v1324
        %v1326 = vand.u32 %v775, 4294901760
        %1327 = vmatpush.msra.mxu0 %v1326
        %v1328 = vand.u32 %v773, 4294901760
        %1329 = vmatpush.msra.mxu0 %v1328
        %v1330 = vand.u32 %v765, 4294901760
        %1331 = vmatmul.f32.gmra.mxu0 %v1330
        %v1332 = vpop.f32.mrf.mxu0
        %v1333 = vadd.f32 %v1268, %v1332
        %v1334 = vand.u32 %v766, 4294901760
        %1335 = vmatmul.f32.gmra.mxu0 %v1334
        %v1336 = vpop.f32.mrf.mxu0
        %v1337 = vadd.f32 %v1272, %v1336
        %v1338 = vand.u32 %v767, 4294901760
        %1339 = vmatmul.f32.gmra.mxu0 %v1338
        %v1340 = vpop.f32.mrf.mxu0
        %v1341 = vadd.f32 %v1276, %v1340
        %v1342 = vand.u32 %v768, 4294901760
        %1343 = vmatmul.f32.gmra.mxu0 %v1342
        %v1344 = vpop.f32.mrf.mxu0
        %v1345 = vadd.f32 %v1280, %v1344
        %v1346 = vand.u32 %v769, 4294901760
        %1347 = vmatmul.f32.gmra.mxu0 %v1346
        %v1348 = vpop.f32.mrf.mxu0
        %v1349 = vadd.f32 %v1284, %v1348
        %v1350 = vand.u32 %v770, 4294901760
        %1351 = vmatmul.f32.gmra.mxu0 %v1350
        %v1352 = vpop.f32.mrf.mxu0
        %v1353 = vadd.f32 %v1288, %v1352
        %v1354 = vand.u32 %v771, 4294901760
        %1355 = vmatmul.f32.gmra.mxu0 %v1354
        %v1356 = vpop.f32.mrf.mxu0
        %v1357 = vadd.f32 %v1292, %v1356
        %v1358 = vand.u32 %v772, 4294901760
        %1359 = vmatmul.f32.gmra.mxu0 %v1358
        %v1360 = vpop.f32.mrf.mxu0
        %v1361 = vadd.f32 %v1296, %v1360
        %1362 = vdwg.mxu0
        %v1363 = vand.u32 %v804, 4294901760
        %1364 = vmatpush.msra.mxu0 %v1363
        %v1365 = vand.u32 %v802, 4294901760
        %1366 = vmatpush.msra.mxu0 %v1365
        %v1367 = vand.u32 %v800, 4294901760
        %1368 = vmatpush.msra.mxu0 %v1367
        %v1369 = vand.u32 %v798, 4294901760
        %1370 = vmatpush.msra.mxu0 %v1369
        %v1371 = vand.u32 %v796, 4294901760
        %1372 = vmatpush.msra.mxu0 %v1371
        %v1373 = vand.u32 %v794, 4294901760
        %1374 = vmatpush.msra.mxu0 %v1373
        %v1375 = vand.u32 %v792, 4294901760
        %1376 = vmatpush.msra.mxu0 %v1375
        %v1377 = vand.u32 %v790, 4294901760
        %1378 = vmatpush.msra.mxu0 %v1377
        %v1379 = vand.u32 %v788, 4294901760
        %1380 = vmatpush.msra.mxu0 %v1379
        %v1381 = vand.u32 %v786, 4294901760
        %1382 = vmatpush.msra.mxu0 %v1381
        %v1383 = vand.u32 %v784, 4294901760
        %1384 = vmatpush.msra.mxu0 %v1383
        %v1385 = vand.u32 %v782, 4294901760
        %1386 = vmatpush.msra.mxu0 %v1385
        %v1387 = vand.u32 %v780, 4294901760
        %1388 = vmatpush.msra.mxu0 %v1387
        %v1389 = vand.u32 %v778, 4294901760
        %1390 = vmatpush.msra.mxu0 %v1389
        %v1391 = vand.u32 %v776, 4294901760
        %1392 = vmatpush.msra.mxu0 %v1391
        %v1393 = vand.u32 %v774, 4294901760
        %1394 = vmatpush.msra.mxu0 %v1393
        %v1395 = vand.u32 %v765, 4294901760
        %v1396 = vsub.f32 %v765, %v1395
        %v1397 = vand.u32 %v1396, 4294901760
        %v1398 = vsub.f32 %v1396, %v1397
        %v1399 = vand.u32 %v1398, 4294901760
        %1400 = vmatmul.f32.gmra.mxu0 %v1399
        %v1401 = vpop.f32.mrf.mxu0
        %v1402 = vadd.f32 0.0, %v1401
        %v1403 = vand.u32 %v766, 4294901760
        %v1404 = vsub.f32 %v766, %v1403
        %v1405 = vand.u32 %v1404, 4294901760
        %v1406 = vsub.f32 %v1404, %v1405
        %v1407 = vand.u32 %v1406, 4294901760
        %1408 = vmatmul.f32.gmra.mxu0 %v1407
        %v1409 = vpop.f32.mrf.mxu0
        %v1410 = vadd.f32 0.0, %v1409
        %v1411 = vand.u32 %v767, 4294901760
        %v1412 = vsub.f32 %v767, %v1411
        %v1413 = vand.u32 %v1412, 4294901760
        %v1414 = vsub.f32 %v1412, %v1413
        %v1415 = vand.u32 %v1414, 4294901760
        %1416 = vmatmul.f32.gmra.mxu0 %v1415
        %v1417 = vpop.f32.mrf.mxu0
        %v1418 = vadd.f32 0.0, %v1417
        %v1419 = vand.u32 %v768, 4294901760
        %v1420 = vsub.f32 %v768, %v1419
        %v1421 = vand.u32 %v1420, 4294901760
        %v1422 = vsub.f32 %v1420, %v1421
        %v1423 = vand.u32 %v1422, 4294901760
        %1424 = vmatmul.f32.gmra.mxu0 %v1423
        %v1425 = vpop.f32.mrf.mxu0
        %v1426 = vadd.f32 0.0, %v1425
        %v1427 = vand.u32 %v769, 4294901760
        %v1428 = vsub.f32 %v769, %v1427
        %v1429 = vand.u32 %v1428, 4294901760
        %v1430 = vsub.f32 %v1428, %v1429
        %v1431 = vand.u32 %v1430, 4294901760
        %1432 = vmatmul.f32.gmra.mxu0 %v1431
        %v1433 = vpop.f32.mrf.mxu0
        %v1434 = vadd.f32 0.0, %v1433
        %v1435 = vand.u32 %v770, 4294901760
        %v1436 = vsub.f32 %v770, %v1435
        %v1437 = vand.u32 %v1436, 4294901760
        %v1438 = vsub.f32 %v1436, %v1437
        %v1439 = vand.u32 %v1438, 4294901760
        %1440 = vmatmul.f32.gmra.mxu0 %v1439
        %v1441 = vpop.f32.mrf.mxu0
        %v1442 = vadd.f32 0.0, %v1441
        %v1443 = vand.u32 %v771, 4294901760
        %v1444 = vsub.f32 %v771, %v1443
        %v1445 = vand.u32 %v1444, 4294901760
        %v1446 = vsub.f32 %v1444, %v1445
        %v1447 = vand.u32 %v1446, 4294901760
        %1448 = vmatmul.f32.gmra.mxu0 %v1447
        %v1449 = vpop.f32.mrf.mxu0
        %v1450 = vadd.f32 0.0, %v1449
        %v1451 = vand.u32 %v772, 4294901760
        %v1452 = vsub.f32 %v772, %v1451
        %v1453 = vand.u32 %v1452, 4294901760
        %v1454 = vsub.f32 %v1452, %v1453
        %v1455 = vand.u32 %v1454, 4294901760
        %1456 = vmatmul.f32.gmra.mxu0 %v1455
        %v1457 = vpop.f32.mrf.mxu0
        %v1458 = vadd.f32 0.0, %v1457
        %1459 = vdwg.mxu0
        %v1460 = vand.u32 %v804, 4294901760
        %v1461 = vsub.f32 %v804, %v1460
        %v1462 = vand.u32 %v1461, 4294901760
        %v1463 = vsub.f32 %v1461, %v1462
        %v1464 = vand.u32 %v1463, 4294901760
        %1465 = vmatpush.msra.mxu0 %v1464
        %v1466 = vand.u32 %v802, 4294901760
        %v1467 = vsub.f32 %v802, %v1466
        %v1468 = vand.u32 %v1467, 4294901760
        %v1469 = vsub.f32 %v1467, %v1468
        %v1470 = vand.u32 %v1469, 4294901760
        %1471 = vmatpush.msra.mxu0 %v1470
        %v1472 = vand.u32 %v800, 4294901760
        %v1473 = vsub.f32 %v800, %v1472
        %v1474 = vand.u32 %v1473, 4294901760
        %v1475 = vsub.f32 %v1473, %v1474
        %v1476 = vand.u32 %v1475, 4294901760
        %1477 = vmatpush.msra.mxu0 %v1476
        %v1478 = vand.u32 %v798, 4294901760
        %v1479 = vsub.f32 %v798, %v1478
        %v1480 = vand.u32 %v1479, 4294901760
        %v1481 = vsub.f32 %v1479, %v1480
        %v1482 = vand.u32 %v1481, 4294901760
        %1483 = vmatpush.msra.mxu0 %v1482
        %v1484 = vand.u32 %v796, 4294901760
        %v1485 = vsub.f32 %v796, %v1484
        %v1486 = vand.u32 %v1485, 4294901760
        %v1487 = vsub.f32 %v1485, %v1486
        %v1488 = vand.u32 %v1487, 4294901760
        %1489 = vmatpush.msra.mxu0 %v1488
        %v1490 = vand.u32 %v794, 4294901760
        %v1491 = vsub.f32 %v794, %v1490
        %v1492 = vand.u32 %v1491, 4294901760
        %v1493 = vsub.f32 %v1491, %v1492
        %v1494 = vand.u32 %v1493, 4294901760
        %1495 = vmatpush.msra.mxu0 %v1494
        %v1496 = vand.u32 %v792, 4294901760
        %v1497 = vsub.f32 %v792, %v1496
        %v1498 = vand.u32 %v1497, 4294901760
        %v1499 = vsub.f32 %v1497, %v1498
        %v1500 = vand.u32 %v1499, 4294901760
        %1501 = vmatpush.msra.mxu0 %v1500
        %v1502 = vand.u32 %v790, 4294901760
        %v1503 = vsub.f32 %v790, %v1502
        %v1504 = vand.u32 %v1503, 4294901760
        %v1505 = vsub.f32 %v1503, %v1504
        %v1506 = vand.u32 %v1505, 4294901760
        %1507 = vmatpush.msra.mxu0 %v1506
        %v1508 = vand.u32 %v788, 4294901760
        %v1509 = vsub.f32 %v788, %v1508
        %v1510 = vand.u32 %v1509, 4294901760
        %v1511 = vsub.f32 %v1509, %v1510
        %v1512 = vand.u32 %v1511, 4294901760
        %1513 = vmatpush.msra.mxu0 %v1512
        %v1514 = vand.u32 %v786, 4294901760
        %v1515 = vsub.f32 %v786, %v1514
        %v1516 = vand.u32 %v1515, 4294901760
        %v1517 = vsub.f32 %v1515, %v1516
        %v1518 = vand.u32 %v1517, 4294901760
        %1519 = vmatpush.msra.mxu0 %v1518
        %v1520 = vand.u32 %v784, 4294901760
        %v1521 = vsub.f32 %v784, %v1520
        %v1522 = vand.u32 %v1521, 4294901760
        %v1523 = vsub.f32 %v1521, %v1522
        %v1524 = vand.u32 %v1523, 4294901760
        %1525 = vmatpush.msra.mxu0 %v1524
        %v1526 = vand.u32 %v782, 4294901760
        %v1527 = vsub.f32 %v782, %v1526
        %v1528 = vand.u32 %v1527, 4294901760
        %v1529 = vsub.f32 %v1527, %v1528
        %v1530 = vand.u32 %v1529, 4294901760
        %1531 = vmatpush.msra.mxu0 %v1530
        %v1532 = vand.u32 %v780, 4294901760
        %v1533 = vsub.f32 %v780, %v1532
        %v1534 = vand.u32 %v1533, 4294901760
        %v1535 = vsub.f32 %v1533, %v1534
        %v1536 = vand.u32 %v1535, 4294901760
        %1537 = vmatpush.msra.mxu0 %v1536
        %v1538 = vand.u32 %v778, 4294901760
        %v1539 = vsub.f32 %v778, %v1538
        %v1540 = vand.u32 %v1539, 4294901760
        %v1541 = vsub.f32 %v1539, %v1540
        %v1542 = vand.u32 %v1541, 4294901760
        %1543 = vmatpush.msra.mxu0 %v1542
        %v1544 = vand.u32 %v776, 4294901760
        %v1545 = vsub.f32 %v776, %v1544
        %v1546 = vand.u32 %v1545, 4294901760
        %v1547 = vsub.f32 %v1545, %v1546
        %v1548 = vand.u32 %v1547, 4294901760
        %1549 = vmatpush.msra.mxu0 %v1548
        %v1550 = vand.u32 %v774, 4294901760
        %v1551 = vsub.f32 %v774, %v1550
        %v1552 = vand.u32 %v1551, 4294901760
        %v1553 = vsub.f32 %v1551, %v1552
        %v1554 = vand.u32 %v1553, 4294901760
        %1555 = vmatpush.msra.mxu0 %v1554
        %v1556 = vand.u32 %v765, 4294901760
        %1557 = vmatmul.f32.gmra.mxu0 %v1556
        %v1558 = vpop.f32.mrf.mxu0
        %v1559 = vadd.f32 %v1402, %v1558
        %v1560 = vand.u32 %v766, 4294901760
        %1561 = vmatmul.f32.gmra.mxu0 %v1560
        %v1562 = vpop.f32.mrf.mxu0
        %v1563 = vadd.f32 %v1410, %v1562
        %v1564 = vand.u32 %v767, 4294901760
        %1565 = vmatmul.f32.gmra.mxu0 %v1564
        %v1566 = vpop.f32.mrf.mxu0
        %v1567 = vadd.f32 %v1418, %v1566
        %v1568 = vand.u32 %v768, 4294901760
        %1569 = vmatmul.f32.gmra.mxu0 %v1568
        %v1570 = vpop.f32.mrf.mxu0
        %v1571 = vadd.f32 %v1426, %v1570
        %v1572 = vand.u32 %v769, 4294901760
        %1573 = vmatmul.f32.gmra.mxu0 %v1572
        %v1574 = vpop.f32.mrf.mxu0
        %v1575 = vadd.f32 %v1434, %v1574
        %v1576 = vand.u32 %v770, 4294901760
        %1577 = vmatmul.f32.gmra.mxu0 %v1576
        %v1578 = vpop.f32.mrf.mxu0
        %v1579 = vadd.f32 %v1442, %v1578
        %v1580 = vand.u32 %v771, 4294901760
        %1581 = vmatmul.f32.gmra.mxu0 %v1580
        %v1582 = vpop.f32.mrf.mxu0
        %v1583 = vadd.f32 %v1450, %v1582
        %v1584 = vand.u32 %v772, 4294901760
        %1585 = vmatmul.f32.gmra.mxu0 %v1584
        %v1586 = vpop.f32.mrf.mxu0
        %v1587 = vadd.f32 %v1458, %v1586
        %1588 = vdwg.mxu0
        %v1589 = vand.u32 %v804, 4294901760
        %v1590 = vsub.f32 %v804, %v1589
        %1591 = vmatpush.msra.mxu0 %v1590
        %v1592 = vand.u32 %v802, 4294901760
        %v1593 = vsub.f32 %v802, %v1592
        %1594 = vmatpush.msra.mxu0 %v1593
        %v1595 = vand.u32 %v800, 4294901760
        %v1596 = vsub.f32 %v800, %v1595
        %1597 = vmatpush.msra.mxu0 %v1596
        %v1598 = vand.u32 %v798, 4294901760
        %v1599 = vsub.f32 %v798, %v1598
        %1600 = vmatpush.msra.mxu0 %v1599
        %v1601 = vand.u32 %v796, 4294901760
        %v1602 = vsub.f32 %v796, %v1601
        %1603 = vmatpush.msra.mxu0 %v1602
        %v1604 = vand.u32 %v794, 4294901760
        %v1605 = vsub.f32 %v794, %v1604
        %1606 = vmatpush.msra.mxu0 %v1605
        %v1607 = vand.u32 %v792, 4294901760
        %v1608 = vsub.f32 %v792, %v1607
        %1609 = vmatpush.msra.mxu0 %v1608
        %v1610 = vand.u32 %v790, 4294901760
        %v1611 = vsub.f32 %v790, %v1610
        %1612 = vmatpush.msra.mxu0 %v1611
        %v1613 = vand.u32 %v788, 4294901760
        %v1614 = vsub.f32 %v788, %v1613
        %1615 = vmatpush.msra.mxu0 %v1614
        %v1616 = vand.u32 %v786, 4294901760
        %v1617 = vsub.f32 %v786, %v1616
        %1618 = vmatpush.msra.mxu0 %v1617
        %v1619 = vand.u32 %v784, 4294901760
        %v1620 = vsub.f32 %v784, %v1619
        %1621 = vmatpush.msra.mxu0 %v1620
        %v1622 = vand.u32 %v782, 4294901760
        %v1623 = vsub.f32 %v782, %v1622
        %1624 = vmatpush.msra.mxu0 %v1623
        %v1625 = vand.u32 %v780, 4294901760
        %v1626 = vsub.f32 %v780, %v1625
        %1627 = vmatpush.msra.mxu0 %v1626
        %v1628 = vand.u32 %v778, 4294901760
        %v1629 = vsub.f32 %v778, %v1628
        %1630 = vmatpush.msra.mxu0 %v1629
        %v1631 = vand.u32 %v776, 4294901760
        %v1632 = vsub.f32 %v776, %v1631
        %1633 = vmatpush.msra.mxu0 %v1632
        %v1634 = vand.u32 %v774, 4294901760
        %v1635 = vsub.f32 %v774, %v1634
        %1636 = vmatpush.msra.mxu0 %v1635
        %v1637 = vand.u32 %v765, 4294901760
        %v1638 = vsub.f32 %v765, %v1637
        %1639 = vmatmul.f32.gmra.mxu0 %v1638
        %v1640 = vpop.f32.mrf.mxu0
        %v1641 = vadd.f32 %v1559, %v1640
        %v1642 = vand.u32 %v766, 4294901760
        %v1643 = vsub.f32 %v766, %v1642
        %1644 = vmatmul.f32.gmra.mxu0 %v1643
        %v1645 = vpop.f32.mrf.mxu0
        %v1646 = vadd.f32 %v1563, %v1645
        %v1647 = vand.u32 %v767, 4294901760
        %v1648 = vsub.f32 %v767, %v1647
        %1649 = vmatmul.f32.gmra.mxu0 %v1648
        %v1650 = vpop.f32.mrf.mxu0
        %v1651 = vadd.f32 %v1567, %v1650
        %v1652 = vand.u32 %v768, 4294901760
        %v1653 = vsub.f32 %v768, %v1652
        %1654 = vmatmul.f32.gmra.mxu0 %v1653
        %v1655 = vpop.f32.mrf.mxu0
        %v1656 = vadd.f32 %v1571, %v1655
        %v1657 = vand.u32 %v769, 4294901760
        %v1658 = vsub.f32 %v769, %v1657
        %1659 = vmatmul.f32.gmra.mxu0 %v1658
        %v1660 = vpop.f32.mrf.mxu0
        %v1661 = vadd.f32 %v1575, %v1660
        %v1662 = vand.u32 %v770, 4294901760
        %v1663 = vsub.f32 %v770, %v1662
        %1664 = vmatmul.f32.gmra.mxu0 %v1663
        %v1665 = vpop.f32.mrf.mxu0
        %v1666 = vadd.f32 %v1579, %v1665
        %v1667 = vand.u32 %v771, 4294901760
        %v1668 = vsub.f32 %v771, %v1667
        %1669 = vmatmul.f32.gmra.mxu0 %v1668
        %v1670 = vpop.f32.mrf.mxu0
        %v1671 = vadd.f32 %v1583, %v1670
        %v1672 = vand.u32 %v772, 4294901760
        %v1673 = vsub.f32 %v772, %v1672
        %1674 = vmatmul.f32.gmra.mxu0 %v1673
        %v1675 = vpop.f32.mrf.mxu0
        %v1676 = vadd.f32 %v1587, %v1675
        %1677 = vdwg.mxu0
        %v1678 = vand.u32 %v804, 4294901760
        %1679 = vmatpush.msra.mxu0 %v1678
        %v1680 = vand.u32 %v802, 4294901760
        %1681 = vmatpush.msra.mxu0 %v1680
        %v1682 = vand.u32 %v800, 4294901760
        %1683 = vmatpush.msra.mxu0 %v1682
        %v1684 = vand.u32 %v798, 4294901760
        %1685 = vmatpush.msra.mxu0 %v1684
        %v1686 = vand.u32 %v796, 4294901760
        %1687 = vmatpush.msra.mxu0 %v1686
        %v1688 = vand.u32 %v794, 4294901760
        %1689 = vmatpush.msra.mxu0 %v1688
        %v1690 = vand.u32 %v792, 4294901760
        %1691 = vmatpush.msra.mxu0 %v1690
        %v1692 = vand.u32 %v790, 4294901760
        %1693 = vmatpush.msra.mxu0 %v1692
        %v1694 = vand.u32 %v788, 4294901760
        %1695 = vmatpush.msra.mxu0 %v1694
        %v1696 = vand.u32 %v786, 4294901760
        %1697 = vmatpush.msra.mxu0 %v1696
        %v1698 = vand.u32 %v784, 4294901760
        %1699 = vmatpush.msra.mxu0 %v1698
        %v1700 = vand.u32 %v782, 4294901760
        %1701 = vmatpush.msra.mxu0 %v1700
        %v1702 = vand.u32 %v780, 4294901760
        %1703 = vmatpush.msra.mxu0 %v1702
        %v1704 = vand.u32 %v778, 4294901760
        %1705 = vmatpush.msra.mxu0 %v1704
        %v1706 = vand.u32 %v776, 4294901760
        %1707 = vmatpush.msra.mxu0 %v1706
        %v1708 = vand.u32 %v774, 4294901760
        %1709 = vmatpush.msra.mxu0 %v1708
        %v1710 = vand.u32 %v765, 4294901760
        %v1711 = vsub.f32 %v765, %v1710
        %v1712 = vand.u32 %v1711, 4294901760
        %1713 = vmatmul.f32.gmra.mxu0 %v1712
        %v1714 = vpop.f32.mrf.mxu0
        %v1715 = vadd.f32 %v1641, %v1714
        %v1716 = vand.u32 %v766, 4294901760
        %v1717 = vsub.f32 %v766, %v1716
        %v1718 = vand.u32 %v1717, 4294901760
        %1719 = vmatmul.f32.gmra.mxu0 %v1718
        %v1720 = vpop.f32.mrf.mxu0
        %v1721 = vadd.f32 %v1646, %v1720
        %v1722 = vand.u32 %v767, 4294901760
        %v1723 = vsub.f32 %v767, %v1722
        %v1724 = vand.u32 %v1723, 4294901760
        %1725 = vmatmul.f32.gmra.mxu0 %v1724
        %v1726 = vpop.f32.mrf.mxu0
        %v1727 = vadd.f32 %v1651, %v1726
        %v1728 = vand.u32 %v768, 4294901760
        %v1729 = vsub.f32 %v768, %v1728
        %v1730 = vand.u32 %v1729, 4294901760
        %1731 = vmatmul.f32.gmra.mxu0 %v1730
        %v1732 = vpop.f32.mrf.mxu0
        %v1733 = vadd.f32 %v1656, %v1732
        %v1734 = vand.u32 %v769, 4294901760
        %v1735 = vsub.f32 %v769, %v1734
        %v1736 = vand.u32 %v1735, 4294901760
        %1737 = vmatmul.f32.gmra.mxu0 %v1736
        %v1738 = vpop.f32.mrf.mxu0
        %v1739 = vadd.f32 %v1661, %v1738
        %v1740 = vand.u32 %v770, 4294901760
        %v1741 = vsub.f32 %v770, %v1740
        %v1742 = vand.u32 %v1741, 4294901760
        %1743 = vmatmul.f32.gmra.mxu0 %v1742
        %v1744 = vpop.f32.mrf.mxu0
        %v1745 = vadd.f32 %v1666, %v1744
        %v1746 = vand.u32 %v771, 4294901760
        %v1747 = vsub.f32 %v771, %v1746
        %v1748 = vand.u32 %v1747, 4294901760
        %1749 = vmatmul.f32.gmra.mxu0 %v1748
        %v1750 = vpop.f32.mrf.mxu0
        %v1751 = vadd.f32 %v1671, %v1750
        %v1752 = vand.u32 %v772, 4294901760
        %v1753 = vsub.f32 %v772, %v1752
        %v1754 = vand.u32 %v1753, 4294901760
        %1755 = vmatmul.f32.gmra.mxu0 %v1754
        %v1756 = vpop.f32.mrf.mxu0
        %v1757 = vadd.f32 %v1676, %v1756
        %1758 = vdwg.mxu0
        %v1759 = vand.u32 %v804, 4294901760
        %v1760 = vsub.f32 %v804, %v1759
        %v1761 = vand.u32 %v1760, 4294901760
        %1762 = vmatpush.msra.mxu0 %v1761
        %v1763 = vand.u32 %v802, 4294901760
        %v1764 = vsub.f32 %v802, %v1763
        %v1765 = vand.u32 %v1764, 4294901760
        %1766 = vmatpush.msra.mxu0 %v1765
        %v1767 = vand.u32 %v800, 4294901760
        %v1768 = vsub.f32 %v800, %v1767
        %v1769 = vand.u32 %v1768, 4294901760
        %1770 = vmatpush.msra.mxu0 %v1769
        %v1771 = vand.u32 %v798, 4294901760
        %v1772 = vsub.f32 %v798, %v1771
        %v1773 = vand.u32 %v1772, 4294901760
        %1774 = vmatpush.msra.mxu0 %v1773
        %v1775 = vand.u32 %v796, 4294901760
        %v1776 = vsub.f32 %v796, %v1775
        %v1777 = vand.u32 %v1776, 4294901760
        %1778 = vmatpush.msra.mxu0 %v1777
        %v1779 = vand.u32 %v794, 4294901760
        %v1780 = vsub.f32 %v794, %v1779
        %v1781 = vand.u32 %v1780, 4294901760
        %1782 = vmatpush.msra.mxu0 %v1781
        %v1783 = vand.u32 %v792, 4294901760
        %v1784 = vsub.f32 %v792, %v1783
        %v1785 = vand.u32 %v1784, 4294901760
        %1786 = vmatpush.msra.mxu0 %v1785
        %v1787 = vand.u32 %v790, 4294901760
        %v1788 = vsub.f32 %v790, %v1787
        %v1789 = vand.u32 %v1788, 4294901760
        %1790 = vmatpush.msra.mxu0 %v1789
        %v1791 = vand.u32 %v788, 4294901760
        %v1792 = vsub.f32 %v788, %v1791
        %v1793 = vand.u32 %v1792, 4294901760
        %1794 = vmatpush.msra.mxu0 %v1793
        %v1795 = vand.u32 %v786, 4294901760
        %v1796 = vsub.f32 %v786, %v1795
        %v1797 = vand.u32 %v1796, 4294901760
        %1798 = vmatpush.msra.mxu0 %v1797
        %v1799 = vand.u32 %v784, 4294901760
        %v1800 = vsub.f32 %v784, %v1799
        %v1801 = vand.u32 %v1800, 4294901760
        %1802 = vmatpush.msra.mxu0 %v1801
        %v1803 = vand.u32 %v782, 4294901760
        %v1804 = vsub.f32 %v782, %v1803
        %v1805 = vand.u32 %v1804, 4294901760
        %1806 = vmatpush.msra.mxu0 %v1805
        %v1807 = vand.u32 %v780, 4294901760
        %v1808 = vsub.f32 %v780, %v1807
        %v1809 = vand.u32 %v1808, 4294901760
        %1810 = vmatpush.msra.mxu0 %v1809
        %v1811 = vand.u32 %v778, 4294901760
        %v1812 = vsub.f32 %v778, %v1811
        %v1813 = vand.u32 %v1812, 4294901760
        %1814 = vmatpush.msra.mxu0 %v1813
        %v1815 = vand.u32 %v776, 4294901760
        %v1816 = vsub.f32 %v776, %v1815
        %v1817 = vand.u32 %v1816, 4294901760
        %1818 = vmatpush.msra.mxu0 %v1817
        %v1819 = vand.u32 %v774, 4294901760
        %v1820 = vsub.f32 %v774, %v1819
        %v1821 = vand.u32 %v1820, 4294901760
        %1822 = vmatpush.msra.mxu0 %v1821
        %v1823 = vand.u32 %v765, 4294901760
        %1824 = vmatmul.f32.gmra.mxu0 %v1823
        %v1825 = vpop.f32.mrf.mxu0
        %v1826 = vadd.f32 %v1715, %v1825
        %v1827 = vand.u32 %v766, 4294901760
        %1828 = vmatmul.f32.gmra.mxu0 %v1827
        %v1829 = vpop.f32.mrf.mxu0
        %v1830 = vadd.f32 %v1721, %v1829
        %v1831 = vand.u32 %v767, 4294901760
        %1832 = vmatmul.f32.gmra.mxu0 %v1831
        %v1833 = vpop.f32.mrf.mxu0
        %v1834 = vadd.f32 %v1727, %v1833
        %v1835 = vand.u32 %v768, 4294901760
        %1836 = vmatmul.f32.gmra.mxu0 %v1835
        %v1837 = vpop.f32.mrf.mxu0
        %v1838 = vadd.f32 %v1733, %v1837
        %v1839 = vand.u32 %v769, 4294901760
        %1840 = vmatmul.f32.gmra.mxu0 %v1839
        %v1841 = vpop.f32.mrf.mxu0
        %v1842 = vadd.f32 %v1739, %v1841
        %v1843 = vand.u32 %v770, 4294901760
        %1844 = vmatmul.f32.gmra.mxu0 %v1843
        %v1845 = vpop.f32.mrf.mxu0
        %v1846 = vadd.f32 %v1745, %v1845
        %v1847 = vand.u32 %v771, 4294901760
        %1848 = vmatmul.f32.gmra.mxu0 %v1847
        %v1849 = vpop.f32.mrf.mxu0
        %v1850 = vadd.f32 %v1751, %v1849
        %v1851 = vand.u32 %v772, 4294901760
        %1852 = vmatmul.f32.gmra.mxu0 %v1851
        %v1853 = vpop.f32.mrf.mxu0
        %v1854 = vadd.f32 %v1757, %v1853
        %1855 = vdwg.mxu0
        %v1856 = vand.u32 %v804, 4294901760
        %1857 = vmatpush.msra.mxu0 %v1856
        %v1858 = vand.u32 %v802, 4294901760
        %1859 = vmatpush.msra.mxu0 %v1858
        %v1860 = vand.u32 %v800, 4294901760
        %1861 = vmatpush.msra.mxu0 %v1860
        %v1862 = vand.u32 %v798, 4294901760
        %1863 = vmatpush.msra.mxu0 %v1862
        %v1864 = vand.u32 %v796, 4294901760
        %1865 = vmatpush.msra.mxu0 %v1864
        %v1866 = vand.u32 %v794, 4294901760
        %1867 = vmatpush.msra.mxu0 %v1866
        %v1868 = vand.u32 %v792, 4294901760
        %1869 = vmatpush.msra.mxu0 %v1868
        %v1870 = vand.u32 %v790, 4294901760
        %1871 = vmatpush.msra.mxu0 %v1870
        %v1872 = vand.u32 %v788, 4294901760
        %1873 = vmatpush.msra.mxu0 %v1872
        %v1874 = vand.u32 %v786, 4294901760
        %1875 = vmatpush.msra.mxu0 %v1874
        %v1876 = vand.u32 %v784, 4294901760
        %1877 = vmatpush.msra.mxu0 %v1876
        %v1878 = vand.u32 %v782, 4294901760
        %1879 = vmatpush.msra.mxu0 %v1878
        %v1880 = vand.u32 %v780, 4294901760
        %1881 = vmatpush.msra.mxu0 %v1880
        %v1882 = vand.u32 %v778, 4294901760
        %1883 = vmatpush.msra.mxu0 %v1882
        %v1884 = vand.u32 %v776, 4294901760
        %1885 = vmatpush.msra.mxu0 %v1884
        %v1886 = vand.u32 %v774, 4294901760
        %1887 = vmatpush.msra.mxu0 %v1886
        %v1888 = vand.u32 %v765, 4294901760
        %1889 = vmatmul.f32.gmra.mxu0 %v1888
        %v1890 = vpop.f32.mrf.mxu0
        %v1891 = vadd.f32 %v1826, %v1890
        %v1892 = vand.u32 %v766, 4294901760
        %1893 = vmatmul.f32.gmra.mxu0 %v1892
        %v1894 = vpop.f32.mrf.mxu0
        %v1895 = vadd.f32 %v1830, %v1894
        %v1896 = vand.u32 %v767, 4294901760
        %1897 = vmatmul.f32.gmra.mxu0 %v1896
        %v1898 = vpop.f32.mrf.mxu0
        %v1899 = vadd.f32 %v1834, %v1898
        %v1900 = vand.u32 %v768, 4294901760
        %1901 = vmatmul.f32.gmra.mxu0 %v1900
        %v1902 = vpop.f32.mrf.mxu0
        %v1903 = vadd.f32 %v1838, %v1902
        %v1904 = vand.u32 %v769, 4294901760
        %1905 = vmatmul.f32.gmra.mxu0 %v1904
        %v1906 = vpop.f32.mrf.mxu0
        %v1907 = vadd.f32 %v1842, %v1906
        %v1908 = vand.u32 %v770, 4294901760
        %1909 = vmatmul.f32.gmra.mxu0 %v1908
        %v1910 = vpop.f32.mrf.mxu0
        %v1911 = vadd.f32 %v1846, %v1910
        %v1912 = vand.u32 %v771, 4294901760
        %1913 = vmatmul.f32.gmra.mxu0 %v1912
        %v1914 = vpop.f32.mrf.mxu0
        %v1915 = vadd.f32 %v1850, %v1914
        %v1916 = vand.u32 %v772, 4294901760
        %1917 = vmatmul.f32.gmra.mxu0 %v1916
        %v1918 = vpop.f32.mrf.mxu0
        %v1919 = vadd.f32 %v1854, %v1918
        %1920 = vdwg.mxu0
        %v1921 = vsub.f32 %v1333, %v1899
        %v1922 = vsub.f32 %v1337, %v1903
        %v1923 = vsub.f32 %v1349, %v1915
        %v1924 = vsub.f32 %v1353, %v1919
        %1925 = vst [vmem:[%s166] sm:$0xff] %v1921
        %1926 = vst [vmem:[%s166 + $0x8] sm:$0xff] %v1922
        %1927 = vst [vmem:[%s166 + $0x20] sm:$0xff] %v1923
        %1928 = vst [vmem:[%s166 + $0x28] sm:$0xff] %v1924
        %v1929 = vadd.f32 %v1891, %v1341
        %v1930 = vadd.f32 %v1895, %v1345
        %v1931 = vadd.f32 %v1907, %v1357
        %v1932 = vadd.f32 %v1911, %v1361
        %1933 = vst [vmem:[%s166 + $0x10] sm:$0xff] %v1929
        %1934 = vst [vmem:[%s166 + $0x18] sm:$0xff] %v1930
        %1935 = vst [vmem:[%s166 + $0x30] sm:$0xff] %v1931
        %1936 = vst [vmem:[%s166 + $0x38] sm:$0xff] %v1932
        %s1937 = sand.u32 %s93, 1
        %s1938 = scalar_lea.sflag [#allocation4], %s1937
        %s1939 = sand.u32 %s93, 1
        %s1940 = smul.addr %s1939, 64
        %s1941 = scalar_lea.vmem [#allocation3], %s1940
        // Predicated region
        $region33: #{ifft_module.1} parent=31 // pred_check
          %p1942 = pneg %p103
        $region34: #{ifft_module.1} parent=31 // pred_check_branch
          %1944 = sbr.rel (%p1942) target = $region36
        $region35: #{ifft_module.1} parent=31 // pred_region
          %s1945 = smul.u32 2, %s17
          %1947 = vsyncadd %s1938, 0
          %s1948 = smul.addr %s1945, 4
          %s1949 = smul.addr %s1948, 8
          %s1950 = scalar_lea.hbm %s3, %s1949
          %s1951 = sshll.u32 %s1941, 4
          %s1952 = int_to_ptr.vmem [resolvable:$true] %s1951
          %s1953 = sshll.u32 %s1950, 4
          %s1954 = int_to_ptr.hbm [resolvable:$true] %s1953
          %1959 = dma.vmem_to_hbm [thread:$0]  %s1952, 1024, %s1954, %s1938, 128, 128, 8
        $region36: #{ifft_module.1} parent=31 // pred_fallthru
          _
      $region32: #{ifft_module.1} parent=5 // pred_fallthru
        _
      %p1960 = scmp.le.s32.totalorder 2, %s12
      // Predicated region
      $region37: #{ifft_module.1} parent=5 // pred_check
        %p1961 = pneg %p1960
      $region38: #{ifft_module.1} parent=5 // pred_check_branch
        %1963 = sbr.rel (%p1961) target = $region40
      $region39: #{ifft_module.1} parent=5 // pred_region
        %s1964 = ssub.s32 %s12, 2
        // Predicated region
        $region41: #{ifft_module.1} parent=39 // pred_check
          %p1965 = pneg %p109
        $region42: #{ifft_module.1} parent=39 // pred_check_branch
          %1967 = sbr.rel (%p1965) target = $region44
        $region43: #{ifft_module.1} parent=39 // pred_region
          %s1968 = sand.u32 %s94, 1
          %s1969 = scalar_lea.sflag [#allocation4], %s1968
          %s1970 = sand.u32 %s94, 1
          %s1971 = smul.addr %s1970, 64
          %s1972 = scalar_lea.vmem [#allocation3], %s1971
          %1974 = dma.done %s1969, 1024
        $region44: #{ifft_module.1} parent=39 // pred_fallthru
          _
      $region40: #{ifft_module.1} parent=5 // pred_fallthru
        _
    $region6: #{ifft_module.1} parent=1 // loop_footer
      %s16 = sadd.s32 1, %s12
    $region7: #{ifft_module.1} parent=1 // loop_footer_branch
      %11 = sbr.rel target = $region3
    $region8: #{ifft_module.1} parent=1 // loop_exit
      _
    %1975 = vsyncpa [#allocation4], 1
    %s1976 = scalar_lea.sflag [#allocation4], 1
    %1977 = vsyncpa %s1976, 1

</llo_original>
